<compile_context>
chip_gen: v5e
topology: v5e:2x2
jax: 0.10.0
libtpu: 0.0.40
codegen_flags: <defaults>
</compile_context>

<pallas_src>
import functools

import jax
import jax.numpy as jnp
from jax import lax
from jax.experimental import pallas as pl
from jax.experimental.pallas import tpu as pltpu


def _mlp_kernel(x_ref, w1_ref, b1_ref, w2_ref, b2_ref, w3_ref, b3_ref, o_ref,
                *, chunk):
    # x_ref: [tile_rows, IN]   (batch rows on sublanes, native layout)
    # o_ref: [tile_rows, OUT]
    # w1: [IN, HID] fp32, w2: [HID, HID], w3: [HID, OUT] (compute dtype)
    # b*: [1, fan_out] fp32
    w1 = w1_ref[...]
    w2 = w2_ref[...]
    w3 = w3_ref[...]
    cd = w2.dtype

    hid = w1.shape[1]
    out_size = w3.shape[1]
    n_chunks = x_ref.shape[0] // chunk  # static (block shape)

    # Hoisted bias broadcasts: once per grid step, not per chunk
    # (JAX does not CSE broadcast_in_dim).
    b1b = jnp.broadcast_to(b1_ref[...], (chunk, hid))
    b2b = jnp.broadcast_to(b2_ref[...], (chunk, hid))
    b3b = jnp.broadcast_to(b3_ref[...], (chunk, out_size))

    def body(j, carry):
        r0 = pl.multiple_of(j * chunk, chunk)
        xs = x_ref[pl.ds(r0, chunk), :]                       # [chunk, IN] fp32
        # Layer 1: Linear + ReLU (fp32; K=3 so MXU cost is negligible)
        h = jnp.dot(xs, w1, preferred_element_type=jnp.float32) + b1b
        h = jnp.maximum(h, 0.0)
        # Layer 2: Linear + ReLU (bf16 operands by default, fp32 accumulation)
        h = jnp.dot(h.astype(cd), w2, preferred_element_type=jnp.float32) + b2b
        h = jnp.maximum(h, 0.0)
        # Layer 3 (output): Linear
        o = jnp.dot(h.astype(cd), w3, preferred_element_type=jnp.float32) + b3b
        o_ref[pl.ds(r0, chunk), :] = o.astype(o_ref.dtype)
        return carry

    # Bounded unroll: enough for the LLO scheduler to overlap adjacent chunks,
    # small enough that fp32 activations don't spill the 64-vreg file.
    lax.fori_loop(0, n_chunks, body, 0, unroll=2)


def _reference_forward(x, p):
    """Plain-XLA fp32 MLP (also the small-batch fast path)."""
    h = jnp.maximum(x @ p["w1"] + p["b1"], 0.0)
    h = jnp.maximum(h @ p["w2"] + p["b2"], 0.0)
    return h @ p["w3"] + p["b3"]


def predictor_forward(
    x,
    params,
    *,
    chunk_rows=512,          # rows per inner dot (multiple of 8)
    chunks_per_tile=16,      # 16*512 = 8192 rows per grid step
    min_kernel_batch=512,    # below this, XLA-fused MLP beats kernel overhead
    compute_dtype=jnp.bfloat16,  # matmul operand dtype for layers 2/3
):
    """x: [B, in_size] float32. params: dict from init_params (natural layout)."""
    w1, b1 = params["w1"], params["b1"]
    w2, b2 = params["w2"], params["b2"]
    w3, b3 = params["w3"], params["b3"]

    B, in_size = x.shape
    hid = w1.shape[1]
    out_size = w3.shape[1]

    if B < min_kernel_batch:
        # Tiny batch: a Pallas call is pure launch/DMA overhead here.
        return _reference_forward(x, params)

    # --- Tiling ------------------------------------------------------------
    n_chunks = pl.cdiv(B, chunk_rows)
    tile_chunks = min(chunks_per_tile, n_chunks)
    if n_chunks > 1 and tile_chunks >= n_chunks:
        # Keep >= 2 grid tiles so both v7x TensorCores get work.
        tile_chunks = pl.cdiv(n_chunks, 2)
    n_tiles = pl.cdiv(n_chunks, tile_chunks)
    tile_rows = tile_chunks * chunk_rows
    b_pad = n_tiles * tile_rows

    xp = x if b_pad == B else jnp.pad(x, ((0, b_pad - B), (0, 0)))

    # Hidden/output-layer weights in compute dtype; layer 1 + biases stay fp32.
    w2c = w2.astype(compute_dtype)
    w3c = w3.astype(compute_dtype)

    # --- Cost estimate (advisory) -------------------------------------------
    flops = 2 * b_pad * (in_size * hid + hid * hid + hid * out_size)
    bytes_accessed = (
        xp.size * xp.dtype.itemsize
        + 4 * b_pad * out_size
        + w1.size * 4
        + w2c.size * w2c.dtype.itemsize
        + w3c.size * w3c.dtype.itemsize
        + 4 * (hid + hid + out_size)
    )

    kernel = functools.partial(_mlp_kernel, chunk=chunk_rows)

    out = pl.pallas_call(
        kernel,
        out_shape=jax.ShapeDtypeStruct((b_pad, out_size), jnp.float32),
        grid_spec=pltpu.PrefetchScalarGridSpec(
            num_scalar_prefetch=0,
            grid=(n_tiles,),
            in_specs=[
                # x: streamed per grid step, double-buffered by BlockSpec.
                pl.BlockSpec((tile_rows, in_size), lambda i: (i, 0)),
                # Weights/biases: constant index_map -> DMA'd once, stay resident.
                pl.BlockSpec((in_size, hid), lambda i: (0, 0)),
                pl.BlockSpec((1, hid), lambda i: (0, 0)),
                pl.BlockSpec((hid, hid), lambda i: (0, 0)),
                pl.BlockSpec((1, hid), lambda i: (0, 0)),
                pl.BlockSpec((hid, out_size), lambda i: (0, 0)),
                pl.BlockSpec((1, out_size), lambda i: (0, 0)),
            ],
            out_specs=pl.BlockSpec((tile_rows, out_size), lambda i: (i, 0)),
        ),
        compiler_params=pltpu.CompilerParams(
            dimension_semantics=("parallel",),   # independent batch tiles (megacore)
            vmem_limit_bytes=40 * 1024 * 1024,   # lane-padded [rows,3] blocks
        ),
        cost_estimate=pl.CostEstimate(
            flops=int(flops), transcendentals=0, bytes_accessed=int(bytes_accessed)
        ),
    )(xp, w1, b1, w2c, b2, w3c, b3)

    return out[:B] if b_pad != B else out


def init_params(key, in_size=3, hidden_size=64, out_size=3):
    """Deterministic synthetic init (PyTorch-Linear-style uniform bounds).

    Weights are stored in natural orientation [fan_in, fan_out] (= torch W.T)
    and biases as [1, fan_out] so the kernel's row-major (batch-on-sublanes)
    layout needs no transposes anywhere.
    """
    keys = jax.random.split(key, 6)

    def lin(kw, kb, fan_in, fan_out):
        bound = 1.0 / (fan_in ** 0.5)
        w = jax.random.uniform(kw, (fan_in, fan_out), jnp.float32, -bound, bound)
        b = jax.random.uniform(kb, (1, fan_out), jnp.float32, -bound, bound)
        return w, b

    w1, b1 = lin(keys[0], keys[1], in_size, hidden_size)
    w2, b2 = lin(keys[2], keys[3], hidden_size, hidden_size)
    w3, b3 = lin(keys[4], keys[5], hidden_size, out_size)
    return {"w1": w1, "b1": b1, "w2": w2, "b2": b2, "w3": w3, "b3": b3}


# TODO(synk): useBatchNorm=True path (nn.BatchNorm1d) is not implemented; the
# module default (useBatchNorm=False) is what this kernel covers.

if __name__ == "__main__":
    key = jax.random.PRNGKey(0)
    k_params, k_x1, k_x2, k_x3 = jax.random.split(key, 4)

    IN, HID, OUT = 3, 64, 3  # module defaults: in_size=3, hidden_size=64, out_size=3
    params = init_params(k_params, in_size=IN, hidden_size=HID, out_size=OUT)

    # 1) Kernel path, fp32 compute: B=1280 -> padded to 2048, 2 grid tiles.
    x_big = jax.random.normal(k_x1, (1280, IN), dtype=jnp.float32)
    ref_big = _reference_forward(x_big, params)

    out_f32 = predictor_forward(x_big, params, compute_dtype=jnp.float32)
    jax.block_until_ready(out_f32)
    assert out_f32.shape == (1280, OUT)
    assert jnp.allclose(out_f32, ref_big, atol=1e-4, rtol=1e-4)

    # 2) Kernel path, default bf16 compute for layers 2/3 (fp32 accumulation).
    out_bf16 = predictor_forward(x_big, params)
    jax.block_until_ready(out_bf16)
    assert out_bf16.shape == (1280, OUT)
    assert jnp.allclose(out_bf16, ref_big, atol=3e-2, rtol=3e-2)

    # 3) Kernel path with ragged small batch (tests zero-padding, single tile).
    x_mid = jax.random.normal(k_x2, (384, IN), dtype=jnp.float32)
    out_mid = predictor_forward(x_mid, params, min_kernel_batch=128,
                                compute_dtype=jnp.float32)
    jax.block_until_ready(out_mid)
    assert out_mid.shape == (384, OUT)
    assert jnp.allclose(out_mid, _reference_forward(x_mid, params),
                        atol=1e-4, rtol=1e-4)

    # 4) Small-batch fallback (pure XLA; kernel overhead not worth it).
    x_small = jax.random.normal(k_x3, (8, IN), dtype=jnp.float32)
    out_small = predictor_forward(x_small, params)
    jax.block_until_ready(out_small)
    assert out_small.shape == (8, OUT)
    assert jnp.allclose(out_small, _reference_forward(x_small, params),
                        atol=1e-5, rtol=1e-5)

    print("KERNEL_OK")
</pallas_src>

<mosaic_0001>
module attributes {stable_mosaic.version = 11 : i64} {
  func.func @_mlp_kernel(%arg0: i32, %arg1: memref<1024x3xf32, #tpu.memory_space<vmem>>, %arg2: memref<3x64xf32, #tpu.memory_space<vmem>>, %arg3: memref<1x64xf32, #tpu.memory_space<vmem>>, %arg4: memref<64x64xf32, #tpu.memory_space<vmem>>, %arg5: memref<1x64xf32, #tpu.memory_space<vmem>>, %arg6: memref<64x3xf32, #tpu.memory_space<vmem>>, %arg7: memref<1x3xf32, #tpu.memory_space<vmem>>, %arg8: memref<1024x3xf32, #tpu.memory_space<vmem>>) attributes {dimension_semantics = [#tpu.dimension_semantics<parallel>], iteration_bounds = array<i64: 2>, scalar_prefetch = 0 : i64, scratch_operands = 0 : i64, tpu.core_type = #tpu.core_type<tc>, window_params = [{transform_indices = @transform_0, window_bounds = array<i64: 1024, 3>}, {pipeline_mode = #tpu.pipeline_mode<synchronous>, transform_indices = @transform_1, window_bounds = array<i64: 3, 64>}, {pipeline_mode = #tpu.pipeline_mode<synchronous>, transform_indices = @transform_2, window_bounds = array<i64: 1, 64>}, {pipeline_mode = #tpu.pipeline_mode<synchronous>, transform_indices = @transform_3, window_bounds = array<i64: 64, 64>}, {pipeline_mode = #tpu.pipeline_mode<synchronous>, transform_indices = @transform_4, window_bounds = array<i64: 1, 64>}, {pipeline_mode = #tpu.pipeline_mode<synchronous>, transform_indices = @transform_5, window_bounds = array<i64: 64, 3>}, {pipeline_mode = #tpu.pipeline_mode<synchronous>, transform_indices = @transform_6, window_bounds = array<i64: 1, 3>}, {transform_indices = @transform_7, window_bounds = array<i64: 1024, 3>}]} {
    %c0 = arith.constant 0 : index
    %c0_0 = arith.constant 0 : index
    %0 = vector.load %arg2[%c0, %c0_0] : memref<3x64xf32, #tpu.memory_space<vmem>>, vector<3x64xf32>
    %c0_1 = arith.constant 0 : index
    %c0_2 = arith.constant 0 : index
    %1 = vector.load %arg4[%c0_1, %c0_2] : memref<64x64xf32, #tpu.memory_space<vmem>>, vector<64x64xf32>
    %c0_3 = arith.constant 0 : index
    %c0_4 = arith.constant 0 : index
    %2 = vector.load %arg6[%c0_3, %c0_4] : memref<64x3xf32, #tpu.memory_space<vmem>>, vector<64x3xf32>
    %c0_5 = arith.constant 0 : index
    %c0_6 = arith.constant 0 : index
    %3 = vector.load %arg3[%c0_5, %c0_6] : memref<1x64xf32, #tpu.memory_space<vmem>>, vector<1x64xf32>
    %4 = vector.shape_cast %3 : vector<1x64xf32> to vector<1x64xf32>
    %5 = vector.broadcast %4 : vector<1x64xf32> to vector<512x64xf32>
    %c0_7 = arith.constant 0 : index
    %c0_8 = arith.constant 0 : index
    %6 = vector.load %arg5[%c0_7, %c0_8] : memref<1x64xf32, #tpu.memory_space<vmem>>, vector<1x64xf32>
    %7 = vector.shape_cast %6 : vector<1x64xf32> to vector<1x64xf32>
    %8 = vector.broadcast %7 : vector<1x64xf32> to vector<512x64xf32>
    %c0_9 = arith.constant 0 : index
    %c0_10 = arith.constant 0 : index
    %9 = vector.load %arg7[%c0_9, %c0_10] : memref<1x3xf32, #tpu.memory_space<vmem>>, vector<1x3xf32>
    %10 = vector.shape_cast %9 : vector<1x3xf32> to vector<1x3xf32>
    %11 = vector.broadcast %10 : vector<1x3xf32> to vector<512x3xf32>
    %c0_i32 = arith.constant 0 : i32
    %c512_i32 = arith.constant 512 : i32
    %12 = arith.muli %c0_i32, %c512_i32 : i32
    %13 = tpu.assume_multiple %12, 512 : i32
    %14 = arith.index_cast %13 : i32 to index
    %c0_11 = arith.constant 0 : index
    %15 = vector.load %arg1[%14, %c0_11] : memref<1024x3xf32, #tpu.memory_space<vmem>>, vector<512x3xf32>
    %cst = arith.constant dense<0.000000e+00> : vector<512x64xf32>
    %16 = tpu.matmul %15, %0, %cst {dimension_numbers = #tpu.dot_dimension_numbers<[1], [0], [0], [1], [0, 0, 1, 1], [], []>} : vector<512x3xf32>, vector<3x64xf32>, vector<512x64xf32> -> vector<512x64xf32>
    %17 = arith.addf %16, %5 : vector<512x64xf32>
    %cst_12 = arith.constant 0.000000e+00 : f32
    %18 = vector.broadcast %cst_12 : f32 to vector<512x64xf32>
    %19 = arith.maximumf %17, %18 : vector<512x64xf32>
    %cst_13 = arith.constant dense<0.000000e+00> : vector<512x64xf32>
    %20 = tpu.matmul %19, %1, %cst_13 {dimension_numbers = #tpu.dot_dimension_numbers<[1], [0], [0], [1], [0, 0, 1, 1], [], []>} : vector<512x64xf32>, vector<64x64xf32>, vector<512x64xf32> -> vector<512x64xf32>
    %21 = arith.addf %20, %8 : vector<512x64xf32>
    %cst_14 = arith.constant 0.000000e+00 : f32
    %22 = vector.broadcast %cst_14 : f32 to vector<512x64xf32>
    %23 = arith.maximumf %21, %22 : vector<512x64xf32>
    %cst_15 = arith.constant dense<0.000000e+00> : vector<512x3xf32>
    %24 = tpu.matmul %23, %2, %cst_15 {dimension_numbers = #tpu.dot_dimension_numbers<[1], [0], [0], [1], [0, 0, 1, 1], [], []>} : vector<512x64xf32>, vector<64x3xf32>, vector<512x3xf32> -> vector<512x3xf32>
    %25 = arith.addf %24, %11 : vector<512x3xf32>
    %26 = arith.index_cast %13 : i32 to index
    %c0_16 = arith.constant 0 : index
    %27 = vector.load %arg8[%26, %c0_16] : memref<1024x3xf32, #tpu.memory_space<vmem>>, vector<512x3xf32>
    tpu.vector_store %arg8[%26, %c0_16], %25 {strides = array<i32>} : memref<1024x3xf32, #tpu.memory_space<vmem>>, vector<512x3xf32>,
    %c1_i32 = arith.constant 1 : i32
    %c512_i32_17 = arith.constant 512 : i32
    %28 = arith.muli %c1_i32, %c512_i32_17 : i32
    %29 = tpu.assume_multiple %28, 512 : i32
    %30 = arith.index_cast %29 : i32 to index
    %c0_18 = arith.constant 0 : index
    %31 = vector.load %arg1[%30, %c0_18] : memref<1024x3xf32, #tpu.memory_space<vmem>>, vector<512x3xf32>
    %cst_19 = arith.constant dense<0.000000e+00> : vector<512x64xf32>
    %32 = tpu.matmul %31, %0, %cst_19 {dimension_numbers = #tpu.dot_dimension_numbers<[1], [0], [0], [1], [0, 0, 1, 1], [], []>} : vector<512x3xf32>, vector<3x64xf32>, vector<512x64xf32> -> vector<512x64xf32>
    %33 = arith.addf %32, %5 : vector<512x64xf32>
    %cst_20 = arith.constant 0.000000e+00 : f32
    %34 = vector.broadcast %cst_20 : f32 to vector<512x64xf32>
    %35 = arith.maximumf %33, %34 : vector<512x64xf32>
    %cst_21 = arith.constant dense<0.000000e+00> : vector<512x64xf32>
    %36 = tpu.matmul %35, %1, %cst_21 {dimension_numbers = #tpu.dot_dimension_numbers<[1], [0], [0], [1], [0, 0, 1, 1], [], []>} : vector<512x64xf32>, vector<64x64xf32>, vector<512x64xf32> -> vector<512x64xf32>
    %37 = arith.addf %36, %8 : vector<512x64xf32>
    %cst_22 = arith.constant 0.000000e+00 : f32
    %38 = vector.broadcast %cst_22 : f32 to vector<512x64xf32>
    %39 = arith.maximumf %37, %38 : vector<512x64xf32>
    %cst_23 = arith.constant dense<0.000000e+00> : vector<512x3xf32>
    %40 = tpu.matmul %39, %2, %cst_23 {dimension_numbers = #tpu.dot_dimension_numbers<[1], [0], [0], [1], [0, 0, 1, 1], [], []>} : vector<512x64xf32>, vector<64x3xf32>, vector<512x3xf32> -> vector<512x3xf32>
    %41 = arith.addf %40, %11 : vector<512x3xf32>
    %42 = arith.index_cast %29 : i32 to index
    %c0_24 = arith.constant 0 : index
    %43 = vector.load %arg8[%42, %c0_24] : memref<1024x3xf32, #tpu.memory_space<vmem>>, vector<512x3xf32>
    tpu.vector_store %arg8[%42, %c0_24], %41 {strides = array<i32>} : memref<1024x3xf32, #tpu.memory_space<vmem>>, vector<512x3xf32>,
    %c2_i32 = arith.constant 2 : i32
    return
  }
  func.func @transform_0(%arg0: i32) -> (i32, i32) {
    %c0_i32 = arith.constant 0 : i32
    %c0_i32_0 = arith.constant 0 : i32
    return %arg0, %c0_i32 : i32, i32
  }
  func.func @transform_1(%arg0: i32) -> (i32, i32) {
    %c0_i32 = arith.constant 0 : i32
    %c0_i32_0 = arith.constant 0 : i32
    %c0_i32_1 = arith.constant 0 : i32
    return %c0_i32, %c0_i32_0 : i32, i32
  }
  func.func @transform_2(%arg0: i32) -> (i32, i32) {
    %c0_i32 = arith.constant 0 : i32
    %c0_i32_0 = arith.constant 0 : i32
    %c0_i32_1 = arith.constant 0 : i32
    return %c0_i32, %c0_i32_0 : i32, i32
  }
  func.func @transform_3(%arg0: i32) -> (i32, i32) {
    %c0_i32 = arith.constant 0 : i32
    %c0_i32_0 = arith.constant 0 : i32
    %c0_i32_1 = arith.constant 0 : i32
    return %c0_i32, %c0_i32_0 : i32, i32
  }
  func.func @transform_4(%arg0: i32) -> (i32, i32) {
    %c0_i32 = arith.constant 0 : i32
    %c0_i32_0 = arith.constant 0 : i32
    %c0_i32_1 = arith.constant 0 : i32
    return %c0_i32, %c0_i32_0 : i32, i32
  }
  func.func @transform_5(%arg0: i32) -> (i32, i32) {
    %c0_i32 = arith.constant 0 : i32
    %c0_i32_0 = arith.constant 0 : i32
    %c0_i32_1 = arith.constant 0 : i32
    return %c0_i32, %c0_i32_0 : i32, i32
  }
  func.func @transform_6(%arg0: i32) -> (i32, i32) {
    %c0_i32 = arith.constant 0 : i32
    %c0_i32_0 = arith.constant 0 : i32
    %c0_i32_1 = arith.constant 0 : i32
    return %c0_i32, %c0_i32_0 : i32, i32
  }
  func.func @transform_7(%arg0: i32) -> (i32, i32) {
    %c0_i32 = arith.constant 0 : i32
    %c0_i32_0 = arith.constant 0 : i32
    return %arg0, %c0_i32 : i32, i32
  }
}

</mosaic_0001>

<llo_original>
// kernel: tpu_custom_call.1
$region0: #{tpu_custom_call.1}
  #allocation0 [shape = 'u32[]', space=smem, size = 0x4, offset = 0x4, fixed_abs, tag = 'smem constant byte address 0x4 - core index']
  #allocation1 [shape = 'u32[72,128]{1,0:T(1,128)}', space=vmem, size = 0x9000, scoped, tag = 'internal scratch']
  %s0 = inlined_call_operand.vmem [shape: f32[2048,3], index: 0, kind: input, shape index: {}]
  %s1 = inlined_call_operand.vmem [shape: f32[3,64], index: 1, kind: input, shape index: {}]
  %s2 = inlined_call_operand.vmem [shape: f32[1,64], index: 2, kind: input, shape index: {}]
  %s3 = inlined_call_operand.vmem [shape: f32[64,64], index: 3, kind: input, shape index: {}]
  %s4 = inlined_call_operand.vmem [shape: f32[1,64], index: 4, kind: input, shape index: {}]
  %s5 = inlined_call_operand.vmem [shape: f32[64,3], index: 5, kind: input, shape index: {}]
  %s6 = inlined_call_operand.vmem [shape: f32[1,3], index: 6, kind: input, shape index: {}]
  %s7 = inlined_call_operand.vmem [shape: f32[2048,3], index: 7, kind: output, shape index: {}]
  %s8 = sld [smem:[#allocation0]]
  $region61: #{tpu_custom_call.1} parent=0
    _
  %s10 = ssub.s32 1, %s8
  %s11 = scalar_select 0, %s10, %s8
  loop: start=0, step=1, limit=4
  $region2: #{tpu_custom_call.1} parent=0 // loop_pre_header
    _
  $region3: #{tpu_custom_call.1} parent=0 // loop_header
    %s13 = sphi 0, %s17
    %p14 = scmp.ge.s32.totalorder %s13, 4
    %s23 = sphi 0, %s25
    %s26 = sphi 0, %s23
    %s27 = sphi 0, %s26
    %s43 = sphi 0, %s27
    %s47 = sphi 0, %s47
    %s49 = sphi 0, %s47
    %s50 = sphi 0, %s49
    %s64 = sphi 0, %s50
    %s68 = sphi 0, %s68
    %s70 = sphi 0, %s68
    %s71 = sphi 0, %s70
    %s85 = sphi 0, %s71
    %s89 = sphi 0, %s89
    %s91 = sphi 0, %s89
    %s92 = sphi 0, %s91
    %s106 = sphi 0, %s92
    %s110 = sphi 0, %s110
    %s112 = sphi 0, %s110
    %s113 = sphi 0, %s112
    %s127 = sphi 0, %s113
    %s131 = sphi 0, %s131
    %s133 = sphi 0, %s131
    %s134 = sphi 0, %s133
    %s148 = sphi 0, %s134
    %s152 = sphi 0, %s152
    %s154 = sphi 0, %s152
    %s155 = sphi 0, %s154
    %s169 = sphi 0, %s155
    %s175 = sphi 0, %s177
    %s178 = sphi 0, %s175
    %s179 = sphi 0, %s178
    %s195 = sphi 0, %s179
  $region4: #{tpu_custom_call.1} parent=0 // loop_header_branch
    %16 = sbr.rel (%p14) target = $region8
  $region5: #{tpu_custom_call.1} parent=0 // loop_body
    %s18 = ssub.s32 %s13, 1
    %s19 = ssub.s32 %s13, 2
    %s20 = sadd.s32 %s13, 1
    %s21 = ssub.s32 %s13, %s20
    %p22 = scmp.eq.s32.totalorder %s21, 0
    %s24 = sadd.s32 %s23, 1
    %s25 = scalar_select %p22, %s23, %s24
    %p28 = pneg %p22
    %p29 = scmp.eq.s32.totalorder %s13, 1
    %p30 = por %p28, %p29
    %p31 = scmp.ne.s32.totalorder %s23, %s26
    %p32 = scmp.eq.s32.totalorder %s13, 0
    %p33 = por %p31, %p32
    %p34 = scmp.ne.s32.totalorder %s23, %s26
    %p35 = scmp.eq.s32.totalorder %s18, 1
    %p36 = por %p34, %p35
    %p37 = scmp.ne.s32.totalorder %s26, %s27
    %p38 = scmp.eq.s32.totalorder %s18, 0
    %p39 = por %p37, %p38
    %p40 = scmp.ne.s32.totalorder %s26, %s27
    %p41 = scmp.eq.s32.totalorder %s19, 1
    %p42 = por %p40, %p41
    %p44 = scmp.ne.s32.totalorder %s27, %s43
    %p45 = scmp.eq.s32.totalorder %s19, 0
    %p46 = por %p44, %p45
    %s48 = sadd.s32 %s47, 1
    %p51 = scmp.eq.s32.totalorder %s13, 1
    %p52 = scmp.ne.s32.totalorder %s47, %s49
    %p53 = scmp.eq.s32.totalorder %s13, 0
    %p54 = por %p52, %p53
    %p55 = scmp.ne.s32.totalorder %s47, %s49
    %p56 = scmp.eq.s32.totalorder %s18, 1
    %p57 = por %p55, %p56
    %p58 = scmp.ne.s32.totalorder %s49, %s50
    %p59 = scmp.eq.s32.totalorder %s18, 0
    %p60 = por %p58, %p59
    %p61 = scmp.ne.s32.totalorder %s49, %s50
    %p62 = scmp.eq.s32.totalorder %s19, 1
    %p63 = por %p61, %p62
    %p65 = scmp.ne.s32.totalorder %s50, %s64
    %p66 = scmp.eq.s32.totalorder %s19, 0
    %p67 = por %p65, %p66
    %s69 = sadd.s32 %s68, 1
    %p72 = scmp.eq.s32.totalorder %s13, 1
    %p73 = scmp.ne.s32.totalorder %s68, %s70
    %p74 = scmp.eq.s32.totalorder %s13, 0
    %p75 = por %p73, %p74
    %p76 = scmp.ne.s32.totalorder %s68, %s70
    %p77 = scmp.eq.s32.totalorder %s18, 1
    %p78 = por %p76, %p77
    %p79 = scmp.ne.s32.totalorder %s70, %s71
    %p80 = scmp.eq.s32.totalorder %s18, 0
    %p81 = por %p79, %p80
    %p82 = scmp.ne.s32.totalorder %s70, %s71
    %p83 = scmp.eq.s32.totalorder %s19, 1
    %p84 = por %p82, %p83
    %p86 = scmp.ne.s32.totalorder %s71, %s85
    %p87 = scmp.eq.s32.totalorder %s19, 0
    %p88 = por %p86, %p87
    %s90 = sadd.s32 %s89, 1
    %p93 = scmp.eq.s32.totalorder %s13, 1
    %p94 = scmp.ne.s32.totalorder %s89, %s91
    %p95 = scmp.eq.s32.totalorder %s13, 0
    %p96 = por %p94, %p95
    %p97 = scmp.ne.s32.totalorder %s89, %s91
    %p98 = scmp.eq.s32.totalorder %s18, 1
    %p99 = por %p97, %p98
    %p100 = scmp.ne.s32.totalorder %s91, %s92
    %p101 = scmp.eq.s32.totalorder %s18, 0
    %p102 = por %p100, %p101
    %p103 = scmp.ne.s32.totalorder %s91, %s92
    %p104 = scmp.eq.s32.totalorder %s19, 1
    %p105 = por %p103, %p104
    %p107 = scmp.ne.s32.totalorder %s92, %s106
    %p108 = scmp.eq.s32.totalorder %s19, 0
    %p109 = por %p107, %p108
    %s111 = sadd.s32 %s110, 1
    %p114 = scmp.eq.s32.totalorder %s13, 1
    %p115 = scmp.ne.s32.totalorder %s110, %s112
    %p116 = scmp.eq.s32.totalorder %s13, 0
    %p117 = por %p115, %p116
    %p118 = scmp.ne.s32.totalorder %s110, %s112
    %p119 = scmp.eq.s32.totalorder %s18, 1
    %p120 = por %p118, %p119
    %p121 = scmp.ne.s32.totalorder %s112, %s113
    %p122 = scmp.eq.s32.totalorder %s18, 0
    %p123 = por %p121, %p122
    %p124 = scmp.ne.s32.totalorder %s112, %s113
    %p125 = scmp.eq.s32.totalorder %s19, 1
    %p126 = por %p124, %p125
    %p128 = scmp.ne.s32.totalorder %s113, %s127
    %p129 = scmp.eq.s32.totalorder %s19, 0
    %p130 = por %p128, %p129
    %s132 = sadd.s32 %s131, 1
    %p135 = scmp.eq.s32.totalorder %s13, 1
    %p136 = scmp.ne.s32.totalorder %s131, %s133
    %p137 = scmp.eq.s32.totalorder %s13, 0
    %p138 = por %p136, %p137
    %p139 = scmp.ne.s32.totalorder %s131, %s133
    %p140 = scmp.eq.s32.totalorder %s18, 1
    %p141 = por %p139, %p140
    %p142 = scmp.ne.s32.totalorder %s133, %s134
    %p143 = scmp.eq.s32.totalorder %s18, 0
    %p144 = por %p142, %p143
    %p145 = scmp.ne.s32.totalorder %s133, %s134
    %p146 = scmp.eq.s32.totalorder %s19, 1
    %p147 = por %p145, %p146
    %p149 = scmp.ne.s32.totalorder %s134, %s148
    %p150 = scmp.eq.s32.totalorder %s19, 0
    %p151 = por %p149, %p150
    %s153 = sadd.s32 %s152, 1
    %p156 = scmp.eq.s32.totalorder %s13, 1
    %p157 = scmp.ne.s32.totalorder %s152, %s154
    %p158 = scmp.eq.s32.totalorder %s13, 0
    %p159 = por %p157, %p158
    %p160 = scmp.ne.s32.totalorder %s152, %s154
    %p161 = scmp.eq.s32.totalorder %s18, 1
    %p162 = por %p160, %p161
    %p163 = scmp.ne.s32.totalorder %s154, %s155
    %p164 = scmp.eq.s32.totalorder %s18, 0
    %p165 = por %p163, %p164
    %p166 = scmp.ne.s32.totalorder %s154, %s155
    %p167 = scmp.eq.s32.totalorder %s19, 1
    %p168 = por %p166, %p167
    %p170 = scmp.ne.s32.totalorder %s155, %s169
    %p171 = scmp.eq.s32.totalorder %s19, 0
    %p172 = por %p170, %p171
    %s173 = ssub.s32 %s13, %s20
    %p174 = scmp.eq.s32.totalorder %s173, 0
    %s176 = sadd.s32 %s175, 1
    %s177 = scalar_select %p174, %s175, %s176
    %p180 = pneg %p174
    %p181 = scmp.eq.s32.totalorder %s13, 1
    %p182 = por %p180, %p181
    %p183 = scmp.ne.s32.totalorder %s175, %s178
    %p184 = scmp.eq.s32.totalorder %s13, 0
    %p185 = por %p183, %p184
    %p186 = scmp.ne.s32.totalorder %s175, %s178
    %p187 = scmp.eq.s32.totalorder %s18, 1
    %p188 = por %p186, %p187
    %p189 = scmp.ne.s32.totalorder %s178, %s179
    %p190 = scmp.eq.s32.totalorder %s18, 0
    %p191 = por %p189, %p190
    %p192 = scmp.ne.s32.totalorder %s178, %s179
    %p193 = scmp.eq.s32.totalorder %s19, 1
    %p194 = por %p192, %p193
    %p196 = scmp.ne.s32.totalorder %s179, %s195
    %p197 = scmp.eq.s32.totalorder %s19, 0
    %p198 = por %p196, %p197
    %p199 = scmp.le.s32.totalorder 1, %s13
    %p200 = scmp.lt.s32.totalorder %s13, 3
    %p201 = pnand %p199, %p200
    %p202 = pneg %p201
    // Predicated region
    $region9: #{tpu_custom_call.1} parent=5 // pred_check
      _
    $region10: #{tpu_custom_call.1} parent=5 // pred_check_branch
      %204 = sbr.rel (%p201) target = $region12
    $region11: #{tpu_custom_call.1} parent=5 // pred_region
      %s205 = ssub.s32 %s13, 1
      // Predicated region
      $region13: #{tpu_custom_call.1} parent=11 // pred_check
        %p206 = pneg %p60
      $region14: #{tpu_custom_call.1} parent=11 // pred_check_branch
        %208 = sbr.rel (%p206) target = $region16
      $region15: #{tpu_custom_call.1} parent=11 // pred_region
        _
      $region16: #{tpu_custom_call.1} parent=11 // pred_fallthru
        _
      // Predicated region
      $region17: #{tpu_custom_call.1} parent=11 // pred_check
        %p209 = pneg %p81
      $region18: #{tpu_custom_call.1} parent=11 // pred_check_branch
        %211 = sbr.rel (%p209) target = $region20
      $region19: #{tpu_custom_call.1} parent=11 // pred_region
        _
      $region20: #{tpu_custom_call.1} parent=11 // pred_fallthru
        _
      // Predicated region
      $region21: #{tpu_custom_call.1} parent=11 // pred_check
        %p212 = pneg %p102
      $region22: #{tpu_custom_call.1} parent=11 // pred_check_branch
        %214 = sbr.rel (%p212) target = $region24
      $region23: #{tpu_custom_call.1} parent=11 // pred_region
        _
      $region24: #{tpu_custom_call.1} parent=11 // pred_fallthru
        _
      // Predicated region
      $region25: #{tpu_custom_call.1} parent=11 // pred_check
        %p215 = pneg %p123
      $region26: #{tpu_custom_call.1} parent=11 // pred_check_branch
        %217 = sbr.rel (%p215) target = $region28
      $region27: #{tpu_custom_call.1} parent=11 // pred_region
        _
      $region28: #{tpu_custom_call.1} parent=11 // pred_fallthru
        _
      // Predicated region
      $region29: #{tpu_custom_call.1} parent=11 // pred_check
        %p218 = pneg %p144
      $region30: #{tpu_custom_call.1} parent=11 // pred_check_branch
        %220 = sbr.rel (%p218) target = $region32
      $region31: #{tpu_custom_call.1} parent=11 // pred_region
        _
      $region32: #{tpu_custom_call.1} parent=11 // pred_fallthru
        _
      // Predicated region
      $region33: #{tpu_custom_call.1} parent=11 // pred_check
        %p221 = pneg %p165
      $region34: #{tpu_custom_call.1} parent=11 // pred_check_branch
        %223 = sbr.rel (%p221) target = $region36
      $region35: #{tpu_custom_call.1} parent=11 // pred_region
        _
      $region36: #{tpu_custom_call.1} parent=11 // pred_fallthru
        _
    $region12: #{tpu_custom_call.1} parent=5 // pred_fallthru
      _
    %p224 = scmp.lt.s32.totalorder %s13, 2
    // Predicated region
    $region37: #{tpu_custom_call.1} parent=5 // pred_check
      %p225 = pneg %p224
    $region38: #{tpu_custom_call.1} parent=5 // pred_check_branch
      %227 = sbr.rel (%p225) target = $region40
    $region39: #{tpu_custom_call.1} parent=5 // pred_region
      // Predicated region
      $region41: #{tpu_custom_call.1} parent=39 // pred_check
        %p228 = pneg %p33
      $region42: #{tpu_custom_call.1} parent=39 // pred_check_branch
        %230 = sbr.rel (%p228) target = $region44
      $region43: #{tpu_custom_call.1} parent=39 // pred_region
        %s231 = smul.u32 128, %s13
        %p232 = scmp.lt.s32.totalorder %s231, 255
        %s233 = scalar_select %p232, %s231, 255
        %s234 = smul.addr %s233, 8
        %s235 = scalar_lea.vmem %s0, %s234
        %s236 = smul.u32 128, %s13
      $region44: #{tpu_custom_call.1} parent=39 // pred_fallthru
        _
    $region40: #{tpu_custom_call.1} parent=5 // pred_fallthru
      _
    %p237 = scmp.le.s32.totalorder 1, %s13
    %p238 = scmp.lt.s32.totalorder %s13, 3
    %p239 = pnand %p237, %p238
    %p240 = pneg %p239
    // Predicated region
    $region45: #{tpu_custom_call.1} parent=5 // pred_check
      _
    $region46: #{tpu_custom_call.1} parent=5 // pred_check_branch
      %242 = sbr.rel (%p239) target = $region48
    $region47: #{tpu_custom_call.1} parent=5 // pred_region
      %s243 = ssub.s32 %s13, 1
      %s244 = smul.u32 128, %s18
      %p245 = scmp.lt.s32.totalorder %s244, 255
      %s246 = scalar_select %p245, %s244, 255
      %s247 = smul.addr %s246, 8
      %s248 = scalar_lea.vmem %s0, %s247
      %p249 = pneg %p39
      %p250 = pneg %p36
      %p251 = pneg %p60
      %p252 = pneg %p57
      %p253 = pneg %p81
      %p254 = pneg %p78
      %p255 = pneg %p102
      %p256 = pneg %p99
      %p257 = pneg %p123
      %p258 = pneg %p120
      %p259 = pneg %p144
      %p260 = pneg %p141
      %p261 = pneg %p165
      %p262 = pneg %p162
      %p263 = pneg %p191
      %p264 = pneg %p188
      %s265 = smul.u32 128, %s18
      %p266 = scmp.lt.s32.totalorder %s265, 255
      %s267 = scalar_select %p266, %s265, 255
      %s268 = smul.addr %s267, 8
      %s269 = scalar_lea.vmem %s7, %s268
      %s270 = smul.u32 128, %s18
      %p271 = scmp.lt.s32.totalorder %s270, 255
      %s272 = scalar_select %p271, %s270, 255
      %s273 = smul.addr %s272, 8
      %s274 = scalar_lea.vmem %s0, %s273
      %s275 = smul.u32 128, %s18
      %s276 = smul.u32 128, %s18
      %p277 = scmp.lt.s32.totalorder %s276, 255
      %s278 = scalar_select %p277, %s276, 255
      %s279 = smul.addr %s278, 8
      %s280 = scalar_lea.vmem %s7, %s279
      %s281 = smul.u32 128, %s18
      %v282 = vld [vmem:[%s1] sm:$0x7]
      %v283 = vld [vmem:[%s3] sm:$0xff]
      %v284 = vld [vmem:[%s3 + $0x8] sm:$0xff]
      %v285 = vld [vmem:[%s3 + $0x10] sm:$0xff]
      %v286 = vld [vmem:[%s3 + $0x18] sm:$0xff]
      %v287 = vld [vmem:[%s3 + $0x20] sm:$0xff]
      %v288 = vld [vmem:[%s3 + $0x28] sm:$0xff]
      %v289 = vld [vmem:[%s3 + $0x30] sm:$0xff]
      %v290 = vld [vmem:[%s3 + $0x38] sm:$0xff]
      %v291 = vld [vmem:[%s5] sm:$0xff]
      %v292 = vld [vmem:[%s5 + $0x8] sm:$0xff]
      %v293 = vld [vmem:[%s5 + $0x10] sm:$0xff]
      %v294 = vld [vmem:[%s5 + $0x18] sm:$0xff]
      %v295 = vld [vmem:[%s5 + $0x20] sm:$0xff]
      %v296 = vld [vmem:[%s5 + $0x28] sm:$0xff]
      %v297 = vld [vmem:[%s5 + $0x30] sm:$0xff]
      %v298 = vld [vmem:[%s5 + $0x38] sm:$0xff]
      %v299 = vld [vmem:[%s2] sm:$0x1]
      %v301 = vperm.slane %v299, 0
      %v303 = vld [vmem:[%s4] sm:$0x1]
      %v305 = vperm.slane %v303, 0
      %v307 = vld [vmem:[%s6] sm:$0x1]
      %v309 = vperm.slane %v307, 0
      %v311 = vld [vmem:[%s274] sm:$0xff]
      %v312 = vld [vmem:[%s274 + $0x8] sm:$0xff]
      %v313 = vld [vmem:[%s274 + $0x10] sm:$0xff]
      %v314 = vld [vmem:[%s274 + $0x18] sm:$0xff]
      %v315 = vld [vmem:[%s274 + $0x20] sm:$0xff]
      %v316 = vld [vmem:[%s274 + $0x28] sm:$0xff]
      %v317 = vld [vmem:[%s274 + $0x30] sm:$0xff]
      %v318 = vld [vmem:[%s274 + $0x38] sm:$0xff]
      %v319 = vld [vmem:[%s274 + $0x40] sm:$0xff]
      %v320 = vld [vmem:[%s274 + $0x48] sm:$0xff]
      %v321 = vld [vmem:[%s274 + $0x50] sm:$0xff]
      %v322 = vld [vmem:[%s274 + $0x58] sm:$0xff]
      %v323 = vld [vmem:[%s274 + $0x60] sm:$0xff]
      %v324 = vld [vmem:[%s274 + $0x68] sm:$0xff]
      %v325 = vld [vmem:[%s274 + $0x70] sm:$0xff]
      %v326 = vld [vmem:[%s274 + $0x78] sm:$0xff]
      %v327 = vld [vmem:[%s274 + $0x80] sm:$0xff]
      %v328 = vld [vmem:[%s274 + $0x88] sm:$0xff]
      %v329 = vld [vmem:[%s274 + $0x90] sm:$0xff]
      %v330 = vld [vmem:[%s274 + $0x98] sm:$0xff]
      %v331 = vld [vmem:[%s274 + $0xa0] sm:$0xff]
      %v332 = vld [vmem:[%s274 + $0xa8] sm:$0xff]
      %v333 = vld [vmem:[%s274 + $0xb0] sm:$0xff]
      %v334 = vld [vmem:[%s274 + $0xb8] sm:$0xff]
      %v335 = vld [vmem:[%s274 + $0xc0] sm:$0xff]
      %v336 = vld [vmem:[%s274 + $0xc8] sm:$0xff]
      %v337 = vld [vmem:[%s274 + $0xd0] sm:$0xff]
      %v338 = vld [vmem:[%s274 + $0xd8] sm:$0xff]
      %v339 = vld [vmem:[%s274 + $0xe0] sm:$0xff]
      %v340 = vld [vmem:[%s274 + $0xe8] sm:$0xff]
      %v341 = vld [vmem:[%s274 + $0xf0] sm:$0xff]
      %v342 = vld [vmem:[%s274 + $0xf8] sm:$0xff]
      %v343 = vld [vmem:[%s274 + $0x100] sm:$0xff]
      %v344 = vld [vmem:[%s274 + $0x108] sm:$0xff]
      %v345 = vld [vmem:[%s274 + $0x110] sm:$0xff]
      %v346 = vld [vmem:[%s274 + $0x118] sm:$0xff]
      %v347 = vld [vmem:[%s274 + $0x120] sm:$0xff]
      %v348 = vld [vmem:[%s274 + $0x128] sm:$0xff]
      %v349 = vld [vmem:[%s274 + $0x130] sm:$0xff]
      %v350 = vld [vmem:[%s274 + $0x138] sm:$0xff]
      %v351 = vld [vmem:[%s274 + $0x140] sm:$0xff]
      %v352 = vld [vmem:[%s274 + $0x148] sm:$0xff]
      %v353 = vld [vmem:[%s274 + $0x150] sm:$0xff]
      %v354 = vld [vmem:[%s274 + $0x158] sm:$0xff]
      %v355 = vld [vmem:[%s274 + $0x160] sm:$0xff]
      %v356 = vld [vmem:[%s274 + $0x168] sm:$0xff]
      %v357 = vld [vmem:[%s274 + $0x170] sm:$0xff]
      %v358 = vld [vmem:[%s274 + $0x178] sm:$0xff]
      %v359 = vld [vmem:[%s274 + $0x180] sm:$0xff]
      %v360 = vld [vmem:[%s274 + $0x188] sm:$0xff]
      %v361 = vld [vmem:[%s274 + $0x190] sm:$0xff]
      %v362 = vld [vmem:[%s274 + $0x198] sm:$0xff]
      %v363 = vld [vmem:[%s274 + $0x1a0] sm:$0xff]
      %v364 = vld [vmem:[%s274 + $0x1a8] sm:$0xff]
      %v365 = vld [vmem:[%s274 + $0x1b0] sm:$0xff]
      %v366 = vld [vmem:[%s274 + $0x1b8] sm:$0xff]
      %v367 = vld [vmem:[%s274 + $0x1c0] sm:$0xff]
      %v368 = vld [vmem:[%s274 + $0x1c8] sm:$0xff]
      %v369 = vld [vmem:[%s274 + $0x1d0] sm:$0xff]
      %v370 = vld [vmem:[%s274 + $0x1d8] sm:$0xff]
      %v371 = vld [vmem:[%s274 + $0x1e0] sm:$0xff]
      %v372 = vld [vmem:[%s274 + $0x1e8] sm:$0xff]
      %v373 = vld [vmem:[%s274 + $0x1f0] sm:$0xff]
      %v374 = vld [vmem:[%s274 + $0x1f8] sm:$0xff]
      %vm375 = vcmask 23552
      %v377 = vsel %vm375, %v311, 0
      %v380 = vsel %vm375, %v312, 0
      %v383 = vsel %vm375, %v313, 0
      %v386 = vsel %vm375, %v314, 0
      %v389 = vsel %vm375, %v315, 0
      %v392 = vsel %vm375, %v316, 0
      %v395 = vsel %vm375, %v317, 0
      %v398 = vsel %vm375, %v318, 0
      %v401 = vsel %vm375, %v319, 0
      %v404 = vsel %vm375, %v320, 0
      %v407 = vsel %vm375, %v321, 0
      %v410 = vsel %vm375, %v322, 0
      %v413 = vsel %vm375, %v323, 0
      %v416 = vsel %vm375, %v324, 0
      %v419 = vsel %vm375, %v325, 0
      %v422 = vsel %vm375, %v326, 0
      %v425 = vsel %vm375, %v327, 0
      %v428 = vsel %vm375, %v328, 0
      %v431 = vsel %vm375, %v329, 0
      %v434 = vsel %vm375, %v330, 0
      %v437 = vsel %vm375, %v331, 0
      %v440 = vsel %vm375, %v332, 0
      %v443 = vsel %vm375, %v333, 0
      %v446 = vsel %vm375, %v334, 0
      %v449 = vsel %vm375, %v335, 0
      %v452 = vsel %vm375, %v336, 0
      %v455 = vsel %vm375, %v337, 0
      %v458 = vsel %vm375, %v338, 0
      %v461 = vsel %vm375, %v339, 0
      %v464 = vsel %vm375, %v340, 0
      %v467 = vsel %vm375, %v341, 0
      %v470 = vsel %vm375, %v342, 0
      %v473 = vsel %vm375, %v343, 0
      %v476 = vsel %vm375, %v344, 0
      %v479 = vsel %vm375, %v345, 0
      %v482 = vsel %vm375, %v346, 0
      %v485 = vsel %vm375, %v347, 0
      %v488 = vsel %vm375, %v348, 0
      %v491 = vsel %vm375, %v349, 0
      %v494 = vsel %vm375, %v350, 0
      %v497 = vsel %vm375, %v351, 0
      %v500 = vsel %vm375, %v352, 0
      %v503 = vsel %vm375, %v353, 0
      %v506 = vsel %vm375, %v354, 0
      %v509 = vsel %vm375, %v355, 0
      %v512 = vsel %vm375, %v356, 0
      %v515 = vsel %vm375, %v357, 0
      %v518 = vsel %vm375, %v358, 0
      %v521 = vsel %vm375, %v359, 0
      %v524 = vsel %vm375, %v360, 0
      %v527 = vsel %vm375, %v361, 0
      %v530 = vsel %vm375, %v362, 0
      %v533 = vsel %vm375, %v363, 0
      %v536 = vsel %vm375, %v364, 0
      %v539 = vsel %vm375, %v365, 0
      %v542 = vsel %vm375, %v366, 0
      %v545 = vsel %vm375, %v367, 0
      %v548 = vsel %vm375, %v368, 0
      %v551 = vsel %vm375, %v369, 0
      %v554 = vsel %vm375, %v370, 0
      %v557 = vsel %vm375, %v371, 0
      %v560 = vsel %vm375, %v372, 0
      %v563 = vsel %vm375, %v373, 0
      %v566 = vsel %vm375, %v374, 0
      %vm568 = vcmask 1042432
      %v570 = vsel %vm568, %v282, 0
      %572 = vmatpush.msra.mxu0 0.0
      %573 = vmatpush.msra.mxu0 0.0
      %574 = vmatpush.msra.mxu0 0.0
      %575 = vmatpush.msra.mxu0 0.0
      %576 = vmatpush.msra.mxu0 0.0
      %577 = vmatpush.msra.mxu0 0.0
      %578 = vmatpush.msra.mxu0 0.0
      %579 = vmatpush.msra.mxu0 0.0
      %580 = vmatpush.msra.mxu0 0.0
      %581 = vmatpush.msra.mxu0 0.0
      %582 = vmatpush.msra.mxu0 0.0
      %583 = vmatpush.msra.mxu0 0.0
      %584 = vmatpush.msra.mxu0 0.0
      %585 = vmatpush.msra.mxu0 0.0
      %586 = vmatpush.msra.mxu0 0.0
      %587 = vmatpush.msra.mxu0 %v570
      %588 = vmatmul.f32.gmra.mxu0 %v377
      %v589 = vpop.f32.mrf.mxu0
      %v590 = vadd.f32 %v301, %v589
      %591 = vmatmul.f32.gmra.mxu0 %v380
      %v592 = vpop.f32.mrf.mxu0
      %v593 = vadd.f32 %v301, %v592
      %594 = vmatmul.f32.gmra.mxu0 %v383
      %v595 = vpop.f32.mrf.mxu0
      %v596 = vadd.f32 %v301, %v595
      %597 = vmatmul.f32.gmra.mxu0 %v386
      %v598 = vpop.f32.mrf.mxu0
      %v599 = vadd.f32 %v301, %v598
      %600 = vmatmul.f32.gmra.mxu0 %v389
      %v601 = vpop.f32.mrf.mxu0
      %v602 = vadd.f32 %v301, %v601
      %603 = vmatmul.f32.gmra.mxu0 %v392
      %v604 = vpop.f32.mrf.mxu0
      %v605 = vadd.f32 %v301, %v604
      %606 = vmatmul.f32.gmra.mxu0 %v395
      %v607 = vpop.f32.mrf.mxu0
      %v608 = vadd.f32 %v301, %v607
      %609 = vmatmul.f32.gmra.mxu0 %v398
      %v610 = vpop.f32.mrf.mxu0
      %v611 = vadd.f32 %v301, %v610
      %612 = vmatmul.f32.gmra.mxu0 %v401
      %v613 = vpop.f32.mrf.mxu0
      %v614 = vadd.f32 %v301, %v613
      %615 = vmatmul.f32.gmra.mxu0 %v404
      %v616 = vpop.f32.mrf.mxu0
      %v617 = vadd.f32 %v301, %v616
      %618 = vmatmul.f32.gmra.mxu0 %v407
      %v619 = vpop.f32.mrf.mxu0
      %v620 = vadd.f32 %v301, %v619
      %621 = vmatmul.f32.gmra.mxu0 %v410
      %v622 = vpop.f32.mrf.mxu0
      %v623 = vadd.f32 %v301, %v622
      %624 = vmatmul.f32.gmra.mxu0 %v413
      %v625 = vpop.f32.mrf.mxu0
      %v626 = vadd.f32 %v301, %v625
      %627 = vmatmul.f32.gmra.mxu0 %v416
      %v628 = vpop.f32.mrf.mxu0
      %v629 = vadd.f32 %v301, %v628
      %630 = vmatmul.f32.gmra.mxu0 %v419
      %v631 = vpop.f32.mrf.mxu0
      %v632 = vadd.f32 %v301, %v631
      %633 = vmatmul.f32.gmra.mxu0 %v422
      %v634 = vpop.f32.mrf.mxu0
      %v635 = vadd.f32 %v301, %v634
      %636 = vmatmul.f32.gmra.mxu0 %v425
      %v637 = vpop.f32.mrf.mxu0
      %v638 = vadd.f32 %v301, %v637
      %639 = vmatmul.f32.gmra.mxu0 %v428
      %v640 = vpop.f32.mrf.mxu0
      %v641 = vadd.f32 %v301, %v640
      %642 = vmatmul.f32.gmra.mxu0 %v431
      %v643 = vpop.f32.mrf.mxu0
      %v644 = vadd.f32 %v301, %v643
      %645 = vmatmul.f32.gmra.mxu0 %v434
      %v646 = vpop.f32.mrf.mxu0
      %v647 = vadd.f32 %v301, %v646
      %648 = vmatmul.f32.gmra.mxu0 %v437
      %v649 = vpop.f32.mrf.mxu0
      %v650 = vadd.f32 %v301, %v649
      %651 = vmatmul.f32.gmra.mxu0 %v440
      %v652 = vpop.f32.mrf.mxu0
      %v653 = vadd.f32 %v301, %v652
      %654 = vmatmul.f32.gmra.mxu0 %v443
      %v655 = vpop.f32.mrf.mxu0
      %v656 = vadd.f32 %v301, %v655
      %657 = vmatmul.f32.gmra.mxu0 %v446
      %v658 = vpop.f32.mrf.mxu0
      %v659 = vadd.f32 %v301, %v658
      %660 = vmatmul.f32.gmra.mxu0 %v449
      %v661 = vpop.f32.mrf.mxu0
      %v662 = vadd.f32 %v301, %v661
      %663 = vmatmul.f32.gmra.mxu0 %v452
      %v664 = vpop.f32.mrf.mxu0
      %v665 = vadd.f32 %v301, %v664
      %666 = vmatmul.f32.gmra.mxu0 %v455
      %v667 = vpop.f32.mrf.mxu0
      %v668 = vadd.f32 %v301, %v667
      %669 = vmatmul.f32.gmra.mxu0 %v458
      %v670 = vpop.f32.mrf.mxu0
      %v671 = vadd.f32 %v301, %v670
      %672 = vmatmul.f32.gmra.mxu0 %v461
      %v673 = vpop.f32.mrf.mxu0
      %v674 = vadd.f32 %v301, %v673
      %675 = vmatmul.f32.gmra.mxu0 %v464
      %v676 = vpop.f32.mrf.mxu0
      %v677 = vadd.f32 %v301, %v676
      %678 = vmatmul.f32.gmra.mxu0 %v467
      %v679 = vpop.f32.mrf.mxu0
      %v680 = vadd.f32 %v301, %v679
      %681 = vmatmul.f32.gmra.mxu0 %v470
      %v682 = vpop.f32.mrf.mxu0
      %v683 = vadd.f32 %v301, %v682
      %684 = vmatmul.f32.gmra.mxu0 %v473
      %v685 = vpop.f32.mrf.mxu0
      %v686 = vadd.f32 %v301, %v685
      %687 = vmatmul.f32.gmra.mxu0 %v476
      %v688 = vpop.f32.mrf.mxu0
      %v689 = vadd.f32 %v301, %v688
      %690 = vmatmul.f32.gmra.mxu0 %v479
      %v691 = vpop.f32.mrf.mxu0
      %v692 = vadd.f32 %v301, %v691
      %693 = vmatmul.f32.gmra.mxu0 %v482
      %v694 = vpop.f32.mrf.mxu0
      %v695 = vadd.f32 %v301, %v694
      %696 = vmatmul.f32.gmra.mxu0 %v485
      %v697 = vpop.f32.mrf.mxu0
      %v698 = vadd.f32 %v301, %v697
      %699 = vmatmul.f32.gmra.mxu0 %v488
      %v700 = vpop.f32.mrf.mxu0
      %v701 = vadd.f32 %v301, %v700
      %702 = vmatmul.f32.gmra.mxu0 %v491
      %v703 = vpop.f32.mrf.mxu0
      %v704 = vadd.f32 %v301, %v703
      %705 = vmatmul.f32.gmra.mxu0 %v494
      %v706 = vpop.f32.mrf.mxu0
      %v707 = vadd.f32 %v301, %v706
      %708 = vmatmul.f32.gmra.mxu0 %v497
      %v709 = vpop.f32.mrf.mxu0
      %v710 = vadd.f32 %v301, %v709
      %711 = vmatmul.f32.gmra.mxu0 %v500
      %v712 = vpop.f32.mrf.mxu0
      %v713 = vadd.f32 %v301, %v712
      %714 = vmatmul.f32.gmra.mxu0 %v503
      %v715 = vpop.f32.mrf.mxu0
      %v716 = vadd.f32 %v301, %v715
      %717 = vmatmul.f32.gmra.mxu0 %v506
      %v718 = vpop.f32.mrf.mxu0
      %v719 = vadd.f32 %v301, %v718
      %720 = vmatmul.f32.gmra.mxu0 %v509
      %v721 = vpop.f32.mrf.mxu0
      %v722 = vadd.f32 %v301, %v721
      %723 = vmatmul.f32.gmra.mxu0 %v512
      %v724 = vpop.f32.mrf.mxu0
      %v725 = vadd.f32 %v301, %v724
      %726 = vmatmul.f32.gmra.mxu0 %v515
      %v727 = vpop.f32.mrf.mxu0
      %v728 = vadd.f32 %v301, %v727
      %729 = vmatmul.f32.gmra.mxu0 %v518
      %v730 = vpop.f32.mrf.mxu0
      %v731 = vadd.f32 %v301, %v730
      %732 = vmatmul.f32.gmra.mxu0 %v521
      %v733 = vpop.f32.mrf.mxu0
      %v734 = vadd.f32 %v301, %v733
      %735 = vmatmul.f32.gmra.mxu0 %v524
      %v736 = vpop.f32.mrf.mxu0
      %v737 = vadd.f32 %v301, %v736
      %738 = vmatmul.f32.gmra.mxu0 %v527
      %v739 = vpop.f32.mrf.mxu0
      %v740 = vadd.f32 %v301, %v739
      %741 = vmatmul.f32.gmra.mxu0 %v530
      %v742 = vpop.f32.mrf.mxu0
      %v743 = vadd.f32 %v301, %v742
      %744 = vmatmul.f32.gmra.mxu0 %v533
      %v745 = vpop.f32.mrf.mxu0
      %v746 = vadd.f32 %v301, %v745
      %747 = vmatmul.f32.gmra.mxu0 %v536
      %v748 = vpop.f32.mrf.mxu0
      %v749 = vadd.f32 %v301, %v748
      %750 = vmatmul.f32.gmra.mxu0 %v539
      %v751 = vpop.f32.mrf.mxu0
      %v752 = vadd.f32 %v301, %v751
      %753 = vmatmul.f32.gmra.mxu0 %v542
      %v754 = vpop.f32.mrf.mxu0
      %v755 = vadd.f32 %v301, %v754
      %756 = vmatmul.f32.gmra.mxu0 %v545
      %v757 = vpop.f32.mrf.mxu0
      %v758 = vadd.f32 %v301, %v757
      %759 = vmatmul.f32.gmra.mxu0 %v548
      %v760 = vpop.f32.mrf.mxu0
      %v761 = vadd.f32 %v301, %v760
      %762 = vmatmul.f32.gmra.mxu0 %v551
      %v763 = vpop.f32.mrf.mxu0
      %v764 = vadd.f32 %v301, %v763
      %765 = vmatmul.f32.gmra.mxu0 %v554
      %v766 = vpop.f32.mrf.mxu0
      %v767 = vadd.f32 %v301, %v766
      %768 = vmatmul.f32.gmra.mxu0 %v557
      %v769 = vpop.f32.mrf.mxu0
      %v770 = vadd.f32 %v301, %v769
      %771 = vmatmul.f32.gmra.mxu0 %v560
      %v772 = vpop.f32.mrf.mxu0
      %v773 = vadd.f32 %v301, %v772
      %774 = vmatmul.f32.gmra.mxu0 %v563
      %v775 = vpop.f32.mrf.mxu0
      %v776 = vadd.f32 %v301, %v775
      %777 = vmatmul.f32.gmra.mxu0 %v566
      %v778 = vpop.f32.mrf.mxu0
      %v779 = vadd.f32 %v301, %v778
      %780 = vdwg.mxu0
      %v781 = vmax.f32 %v590, 0.0
      %v782 = vmax.f32 %v593, 0.0
      %v783 = vmax.f32 %v596, 0.0
      %v784 = vmax.f32 %v599, 0.0
      %v785 = vmax.f32 %v602, 0.0
      %v786 = vmax.f32 %v605, 0.0
      %v787 = vmax.f32 %v608, 0.0
      %v788 = vmax.f32 %v611, 0.0
      %v789 = vmax.f32 %v614, 0.0
      %v790 = vmax.f32 %v617, 0.0
      %v791 = vmax.f32 %v620, 0.0
      %v792 = vmax.f32 %v623, 0.0
      %v793 = vmax.f32 %v626, 0.0
      %v794 = vmax.f32 %v629, 0.0
      %v795 = vmax.f32 %v632, 0.0
      %v796 = vmax.f32 %v635, 0.0
      %v797 = vmax.f32 %v638, 0.0
      %v798 = vmax.f32 %v641, 0.0
      %v799 = vmax.f32 %v644, 0.0
      %v800 = vmax.f32 %v647, 0.0
      %v801 = vmax.f32 %v650, 0.0
      %v802 = vmax.f32 %v653, 0.0
      %v803 = vmax.f32 %v656, 0.0
      %v804 = vmax.f32 %v659, 0.0
      %v805 = vmax.f32 %v662, 0.0
      %v806 = vmax.f32 %v665, 0.0
      %v807 = vmax.f32 %v668, 0.0
      %v808 = vmax.f32 %v671, 0.0
      %v809 = vmax.f32 %v674, 0.0
      %v810 = vmax.f32 %v677, 0.0
      %v811 = vmax.f32 %v680, 0.0
      %v812 = vmax.f32 %v683, 0.0
      %v813 = vmax.f32 %v686, 0.0
      %v814 = vmax.f32 %v689, 0.0
      %v815 = vmax.f32 %v692, 0.0
      %v816 = vmax.f32 %v695, 0.0
      %v817 = vmax.f32 %v698, 0.0
      %v818 = vmax.f32 %v701, 0.0
      %v819 = vmax.f32 %v704, 0.0
      %v820 = vmax.f32 %v707, 0.0
      %v821 = vmax.f32 %v710, 0.0
      %v822 = vmax.f32 %v713, 0.0
      %v823 = vmax.f32 %v716, 0.0
      %v824 = vmax.f32 %v719, 0.0
      %v825 = vmax.f32 %v722, 0.0
      %v826 = vmax.f32 %v725, 0.0
      %v827 = vmax.f32 %v728, 0.0
      %v828 = vmax.f32 %v731, 0.0
      %v829 = vmax.f32 %v734, 0.0
      %v830 = vmax.f32 %v737, 0.0
      %v831 = vmax.f32 %v740, 0.0
      %v832 = vmax.f32 %v743, 0.0
      %v833 = vmax.f32 %v746, 0.0
      %v834 = vmax.f32 %v749, 0.0
      %v835 = vmax.f32 %v752, 0.0
      %v836 = vmax.f32 %v755, 0.0
      %v837 = vmax.f32 %v758, 0.0
      %v838 = vmax.f32 %v761, 0.0
      %v839 = vmax.f32 %v764, 0.0
      %v840 = vmax.f32 %v767, 0.0
      %v841 = vmax.f32 %v770, 0.0
      %v842 = vmax.f32 %v773, 0.0
      %v843 = vmax.f32 %v776, 0.0
      %v844 = vmax.f32 %v779, 0.0
      %vm845 = vcmask 523264
      %v847 = vsel %vm845, %v781, 0
      %v850 = vsel %vm845, %v782, 0
      %v853 = vsel %vm845, %v783, 0
      %v856 = vsel %vm845, %v784, 0
      %v859 = vsel %vm845, %v785, 0
      %v862 = vsel %vm845, %v786, 0
      %v865 = vsel %vm845, %v787, 0
      %v868 = vsel %vm845, %v788, 0
      %v871 = vsel %vm845, %v789, 0
      %v874 = vsel %vm845, %v790, 0
      %v877 = vsel %vm845, %v791, 0
      %v880 = vsel %vm845, %v792, 0
      %v883 = vsel %vm845, %v793, 0
      %v886 = vsel %vm845, %v794, 0
      %v889 = vsel %vm845, %v795, 0
      %v892 = vsel %vm845, %v796, 0
      %v895 = vsel %vm845, %v797, 0
      %v898 = vsel %vm845, %v798, 0
      %v901 = vsel %vm845, %v799, 0
      %v904 = vsel %vm845, %v800, 0
      %v907 = vsel %vm845, %v801, 0
      %v910 = vsel %vm845, %v802, 0
      %v913 = vsel %vm845, %v803, 0
      %v916 = vsel %vm845, %v804, 0
      %v919 = vsel %vm845, %v805, 0
      %v922 = vsel %vm845, %v806, 0
      %v925 = vsel %vm845, %v807, 0
      %v928 = vsel %vm845, %v808, 0
      %v931 = vsel %vm845, %v809, 0
      %v934 = vsel %vm845, %v810, 0
      %v937 = vsel %vm845, %v811, 0
      %v940 = vsel %vm845, %v812, 0
      %v943 = vsel %vm845, %v813, 0
      %v946 = vsel %vm845, %v814, 0
      %v949 = vsel %vm845, %v815, 0
      %v952 = vsel %vm845, %v816, 0
      %v955 = vsel %vm845, %v817, 0
      %v958 = vsel %vm845, %v818, 0
      %v961 = vsel %vm845, %v819, 0
      %v964 = vsel %vm845, %v820, 0
      %v967 = vsel %vm845, %v821, 0
      %v970 = vsel %vm845, %v822, 0
      %v973 = vsel %vm845, %v823, 0
      %v976 = vsel %vm845, %v824, 0
      %v979 = vsel %vm845, %v825, 0
      %v982 = vsel %vm845, %v826, 0
      %v985 = vsel %vm845, %v827, 0
      %v988 = vsel %vm845, %v828, 0
      %v991 = vsel %vm845, %v829, 0
      %v994 = vsel %vm845, %v830, 0
      %v997 = vsel %vm845, %v831, 0
      %v1000 = vsel %vm845, %v832, 0
      %v1003 = vsel %vm845, %v833, 0
      %v1006 = vsel %vm845, %v834, 0
      %v1009 = vsel %vm845, %v835, 0
      %v1012 = vsel %vm845, %v836, 0
      %v1015 = vsel %vm845, %v837, 0
      %v1018 = vsel %vm845, %v838, 0
      %v1021 = vsel %vm845, %v839, 0
      %v1024 = vsel %vm845, %v840, 0
      %v1027 = vsel %vm845, %v841, 0
      %v1030 = vsel %vm845, %v842, 0
      %v1033 = vsel %vm845, %v843, 0
      %v1036 = vsel %vm845, %v844, 0
      %1038 = vmatpush.msra.mxu0 0.0
      %1039 = vmatpush.msra.mxu0 0.0
      %1040 = vmatpush.msra.mxu0 0.0
      %1041 = vmatpush.msra.mxu0 0.0
      %1042 = vmatpush.msra.mxu0 0.0
      %1043 = vmatpush.msra.mxu0 0.0
      %1044 = vmatpush.msra.mxu0 0.0
      %1045 = vmatpush.msra.mxu0 0.0
      %1046 = vmatpush.msra.mxu0 %v290
      %1047 = vmatpush.msra.mxu0 %v289
      %1048 = vmatpush.msra.mxu0 %v288
      %1049 = vmatpush.msra.mxu0 %v287
      %1050 = vmatpush.msra.mxu0 %v286
      %1051 = vmatpush.msra.mxu0 %v285
      %1052 = vmatpush.msra.mxu0 %v284
      %1053 = vmatpush.msra.mxu0 %v283
      %1054 = vmatmul.f32.gmra.mxu0 %v847
      %v1055 = vpop.f32.mrf.mxu0
      %v1056 = vadd.f32 %v305, %v1055
      %1057 = vmatmul.f32.gmra.mxu0 %v850
      %v1058 = vpop.f32.mrf.mxu0
      %v1059 = vadd.f32 %v305, %v1058
      %1060 = vmatmul.f32.gmra.mxu0 %v853
      %v1061 = vpop.f32.mrf.mxu0
      %v1062 = vadd.f32 %v305, %v1061
      %1063 = vmatmul.f32.gmra.mxu0 %v856
      %v1064 = vpop.f32.mrf.mxu0
      %v1065 = vadd.f32 %v305, %v1064
      %1066 = vmatmul.f32.gmra.mxu0 %v859
      %v1067 = vpop.f32.mrf.mxu0
      %v1068 = vadd.f32 %v305, %v1067
      %1069 = vmatmul.f32.gmra.mxu0 %v862
      %v1070 = vpop.f32.mrf.mxu0
      %v1071 = vadd.f32 %v305, %v1070
      %1072 = vmatmul.f32.gmra.mxu0 %v865
      %v1073 = vpop.f32.mrf.mxu0
      %v1074 = vadd.f32 %v305, %v1073
      %1075 = vmatmul.f32.gmra.mxu0 %v868
      %v1076 = vpop.f32.mrf.mxu0
      %v1077 = vadd.f32 %v305, %v1076
      %1078 = vmatmul.f32.gmra.mxu0 %v871
      %v1079 = vpop.f32.mrf.mxu0
      %v1080 = vadd.f32 %v305, %v1079
      %1081 = vmatmul.f32.gmra.mxu0 %v874
      %v1082 = vpop.f32.mrf.mxu0
      %v1083 = vadd.f32 %v305, %v1082
      %1084 = vmatmul.f32.gmra.mxu0 %v877
      %v1085 = vpop.f32.mrf.mxu0
      %v1086 = vadd.f32 %v305, %v1085
      %1087 = vmatmul.f32.gmra.mxu0 %v880
      %v1088 = vpop.f32.mrf.mxu0
      %v1089 = vadd.f32 %v305, %v1088
      %1090 = vmatmul.f32.gmra.mxu0 %v883
      %v1091 = vpop.f32.mrf.mxu0
      %v1092 = vadd.f32 %v305, %v1091
      %1093 = vmatmul.f32.gmra.mxu0 %v886
      %v1094 = vpop.f32.mrf.mxu0
      %v1095 = vadd.f32 %v305, %v1094
      %1096 = vmatmul.f32.gmra.mxu0 %v889
      %v1097 = vpop.f32.mrf.mxu0
      %v1098 = vadd.f32 %v305, %v1097
      %1099 = vmatmul.f32.gmra.mxu0 %v892
      %v1100 = vpop.f32.mrf.mxu0
      %v1101 = vadd.f32 %v305, %v1100
      %1102 = vmatmul.f32.gmra.mxu0 %v895
      %v1103 = vpop.f32.mrf.mxu0
      %v1104 = vadd.f32 %v305, %v1103
      %1105 = vmatmul.f32.gmra.mxu0 %v898
      %v1106 = vpop.f32.mrf.mxu0
      %v1107 = vadd.f32 %v305, %v1106
      %1108 = vmatmul.f32.gmra.mxu0 %v901
      %v1109 = vpop.f32.mrf.mxu0
      %v1110 = vadd.f32 %v305, %v1109
      %1111 = vmatmul.f32.gmra.mxu0 %v904
      %v1112 = vpop.f32.mrf.mxu0
      %v1113 = vadd.f32 %v305, %v1112
      %1114 = vmatmul.f32.gmra.mxu0 %v907
      %v1115 = vpop.f32.mrf.mxu0
      %v1116 = vadd.f32 %v305, %v1115
      %1117 = vmatmul.f32.gmra.mxu0 %v910
      %v1118 = vpop.f32.mrf.mxu0
      %v1119 = vadd.f32 %v305, %v1118
      %1120 = vmatmul.f32.gmra.mxu0 %v913
      %v1121 = vpop.f32.mrf.mxu0
      %v1122 = vadd.f32 %v305, %v1121
      %1123 = vmatmul.f32.gmra.mxu0 %v916
      %v1124 = vpop.f32.mrf.mxu0
      %v1125 = vadd.f32 %v305, %v1124
      %1126 = vmatmul.f32.gmra.mxu0 %v919
      %v1127 = vpop.f32.mrf.mxu0
      %v1128 = vadd.f32 %v305, %v1127
      %1129 = vmatmul.f32.gmra.mxu0 %v922
      %v1130 = vpop.f32.mrf.mxu0
      %v1131 = vadd.f32 %v305, %v1130
      %1132 = vmatmul.f32.gmra.mxu0 %v925
      %v1133 = vpop.f32.mrf.mxu0
      %v1134 = vadd.f32 %v305, %v1133
      %1135 = vmatmul.f32.gmra.mxu0 %v928
      %v1136 = vpop.f32.mrf.mxu0
      %v1137 = vadd.f32 %v305, %v1136
      %1138 = vmatmul.f32.gmra.mxu0 %v931
      %v1139 = vpop.f32.mrf.mxu0
      %v1140 = vadd.f32 %v305, %v1139
      %1141 = vmatmul.f32.gmra.mxu0 %v934
      %v1142 = vpop.f32.mrf.mxu0
      %v1143 = vadd.f32 %v305, %v1142
      %1144 = vmatmul.f32.gmra.mxu0 %v937
      %v1145 = vpop.f32.mrf.mxu0
      %v1146 = vadd.f32 %v305, %v1145
      %1147 = vmatmul.f32.gmra.mxu0 %v940
      %v1148 = vpop.f32.mrf.mxu0
      %v1149 = vadd.f32 %v305, %v1148
      %1150 = vmatmul.f32.gmra.mxu0 %v943
      %v1151 = vpop.f32.mrf.mxu0
      %v1152 = vadd.f32 %v305, %v1151
      %1153 = vmatmul.f32.gmra.mxu0 %v946
      %v1154 = vpop.f32.mrf.mxu0
      %v1155 = vadd.f32 %v305, %v1154
      %1156 = vmatmul.f32.gmra.mxu0 %v949
      %v1157 = vpop.f32.mrf.mxu0
      %v1158 = vadd.f32 %v305, %v1157
      %1159 = vmatmul.f32.gmra.mxu0 %v952
      %v1160 = vpop.f32.mrf.mxu0
      %v1161 = vadd.f32 %v305, %v1160
      %1162 = vmatmul.f32.gmra.mxu0 %v955
      %v1163 = vpop.f32.mrf.mxu0
      %v1164 = vadd.f32 %v305, %v1163
      %1165 = vmatmul.f32.gmra.mxu0 %v958
      %v1166 = vpop.f32.mrf.mxu0
      %v1167 = vadd.f32 %v305, %v1166
      %1168 = vmatmul.f32.gmra.mxu0 %v961
      %v1169 = vpop.f32.mrf.mxu0
      %v1170 = vadd.f32 %v305, %v1169
      %1171 = vmatmul.f32.gmra.mxu0 %v964
      %v1172 = vpop.f32.mrf.mxu0
      %v1173 = vadd.f32 %v305, %v1172
      %1174 = vmatmul.f32.gmra.mxu0 %v967
      %v1175 = vpop.f32.mrf.mxu0
      %v1176 = vadd.f32 %v305, %v1175
      %1177 = vmatmul.f32.gmra.mxu0 %v970
      %v1178 = vpop.f32.mrf.mxu0
      %v1179 = vadd.f32 %v305, %v1178
      %1180 = vmatmul.f32.gmra.mxu0 %v973
      %v1181 = vpop.f32.mrf.mxu0
      %v1182 = vadd.f32 %v305, %v1181
      %1183 = vmatmul.f32.gmra.mxu0 %v976
      %v1184 = vpop.f32.mrf.mxu0
      %v1185 = vadd.f32 %v305, %v1184
      %1186 = vmatmul.f32.gmra.mxu0 %v979
      %v1187 = vpop.f32.mrf.mxu0
      %v1188 = vadd.f32 %v305, %v1187
      %1189 = vmatmul.f32.gmra.mxu0 %v982
      %v1190 = vpop.f32.mrf.mxu0
      %v1191 = vadd.f32 %v305, %v1190
      %1192 = vmatmul.f32.gmra.mxu0 %v985
      %v1193 = vpop.f32.mrf.mxu0
      %v1194 = vadd.f32 %v305, %v1193
      %1195 = vmatmul.f32.gmra.mxu0 %v988
      %v1196 = vpop.f32.mrf.mxu0
      %v1197 = vadd.f32 %v305, %v1196
      %1198 = vmatmul.f32.gmra.mxu0 %v991
      %v1199 = vpop.f32.mrf.mxu0
      %v1200 = vadd.f32 %v305, %v1199
      %1201 = vmatmul.f32.gmra.mxu0 %v994
      %v1202 = vpop.f32.mrf.mxu0
      %v1203 = vadd.f32 %v305, %v1202
      %1204 = vmatmul.f32.gmra.mxu0 %v997
      %v1205 = vpop.f32.mrf.mxu0
      %v1206 = vadd.f32 %v305, %v1205
      %1207 = vmatmul.f32.gmra.mxu0 %v1000
      %v1208 = vpop.f32.mrf.mxu0
      %v1209 = vadd.f32 %v305, %v1208
      %1210 = vmatmul.f32.gmra.mxu0 %v1003
      %v1211 = vpop.f32.mrf.mxu0
      %v1212 = vadd.f32 %v305, %v1211
      %1213 = vmatmul.f32.gmra.mxu0 %v1006
      %v1214 = vpop.f32.mrf.mxu0
      %v1215 = vadd.f32 %v305, %v1214
      %1216 = vmatmul.f32.gmra.mxu0 %v1009
      %v1217 = vpop.f32.mrf.mxu0
      %v1218 = vadd.f32 %v305, %v1217
      %1219 = vmatmul.f32.gmra.mxu0 %v1012
      %v1220 = vpop.f32.mrf.mxu0
      %v1221 = vadd.f32 %v305, %v1220
      %1222 = vmatmul.f32.gmra.mxu0 %v1015
      %v1223 = vpop.f32.mrf.mxu0
      %v1224 = vadd.f32 %v305, %v1223
      %1225 = vmatmul.f32.gmra.mxu0 %v1018
      %v1226 = vpop.f32.mrf.mxu0
      %v1227 = vadd.f32 %v305, %v1226
      %1228 = vmatmul.f32.gmra.mxu0 %v1021
      %v1229 = vpop.f32.mrf.mxu0
      %v1230 = vadd.f32 %v305, %v1229
      %1231 = vmatmul.f32.gmra.mxu0 %v1024
      %v1232 = vpop.f32.mrf.mxu0
      %v1233 = vadd.f32 %v305, %v1232
      %1234 = vmatmul.f32.gmra.mxu0 %v1027
      %v1235 = vpop.f32.mrf.mxu0
      %v1236 = vadd.f32 %v305, %v1235
      %1237 = vmatmul.f32.gmra.mxu0 %v1030
      %v1238 = vpop.f32.mrf.mxu0
      %v1239 = vadd.f32 %v305, %v1238
      %1240 = vmatmul.f32.gmra.mxu0 %v1033
      %v1241 = vpop.f32.mrf.mxu0
      %v1242 = vadd.f32 %v305, %v1241
      %1243 = vmatmul.f32.gmra.mxu0 %v1036
      %v1244 = vpop.f32.mrf.mxu0
      %v1245 = vadd.f32 %v305, %v1244
      %1246 = vdwg.mxu0
      %v1247 = vmax.f32 %v1056, 0.0
      %v1248 = vmax.f32 %v1059, 0.0
      %v1249 = vmax.f32 %v1062, 0.0
      %v1250 = vmax.f32 %v1065, 0.0
      %v1251 = vmax.f32 %v1068, 0.0
      %v1252 = vmax.f32 %v1071, 0.0
      %v1253 = vmax.f32 %v1074, 0.0
      %v1254 = vmax.f32 %v1077, 0.0
      %v1255 = vmax.f32 %v1080, 0.0
      %v1256 = vmax.f32 %v1083, 0.0
      %v1257 = vmax.f32 %v1086, 0.0
      %v1258 = vmax.f32 %v1089, 0.0
      %v1259 = vmax.f32 %v1092, 0.0
      %v1260 = vmax.f32 %v1095, 0.0
      %v1261 = vmax.f32 %v1098, 0.0
      %v1262 = vmax.f32 %v1101, 0.0
      %v1263 = vmax.f32 %v1104, 0.0
      %v1264 = vmax.f32 %v1107, 0.0
      %v1265 = vmax.f32 %v1110, 0.0
      %v1266 = vmax.f32 %v1113, 0.0
      %v1267 = vmax.f32 %v1116, 0.0
      %v1268 = vmax.f32 %v1119, 0.0
      %v1269 = vmax.f32 %v1122, 0.0
      %v1270 = vmax.f32 %v1125, 0.0
      %v1271 = vmax.f32 %v1128, 0.0
      %v1272 = vmax.f32 %v1131, 0.0
      %v1273 = vmax.f32 %v1134, 0.0
      %v1274 = vmax.f32 %v1137, 0.0
      %v1275 = vmax.f32 %v1140, 0.0
      %v1276 = vmax.f32 %v1143, 0.0
      %v1277 = vmax.f32 %v1146, 0.0
      %v1278 = vmax.f32 %v1149, 0.0
      %v1279 = vmax.f32 %v1152, 0.0
      %v1280 = vmax.f32 %v1155, 0.0
      %v1281 = vmax.f32 %v1158, 0.0
      %v1282 = vmax.f32 %v1161, 0.0
      %v1283 = vmax.f32 %v1164, 0.0
      %v1284 = vmax.f32 %v1167, 0.0
      %v1285 = vmax.f32 %v1170, 0.0
      %v1286 = vmax.f32 %v1173, 0.0
      %v1287 = vmax.f32 %v1176, 0.0
      %v1288 = vmax.f32 %v1179, 0.0
      %v1289 = vmax.f32 %v1182, 0.0
      %v1290 = vmax.f32 %v1185, 0.0
      %v1291 = vmax.f32 %v1188, 0.0
      %v1292 = vmax.f32 %v1191, 0.0
      %v1293 = vmax.f32 %v1194, 0.0
      %v1294 = vmax.f32 %v1197, 0.0
      %v1295 = vmax.f32 %v1200, 0.0
      %v1296 = vmax.f32 %v1203, 0.0
      %v1297 = vmax.f32 %v1206, 0.0
      %v1298 = vmax.f32 %v1209, 0.0
      %v1299 = vmax.f32 %v1212, 0.0
      %v1300 = vmax.f32 %v1215, 0.0
      %v1301 = vmax.f32 %v1218, 0.0
      %v1302 = vmax.f32 %v1221, 0.0
      %v1303 = vmax.f32 %v1224, 0.0
      %v1304 = vmax.f32 %v1227, 0.0
      %v1305 = vmax.f32 %v1230, 0.0
      %v1306 = vmax.f32 %v1233, 0.0
      %v1307 = vmax.f32 %v1236, 0.0
      %v1308 = vmax.f32 %v1239, 0.0
      %v1309 = vmax.f32 %v1242, 0.0
      %v1310 = vmax.f32 %v1245, 0.0
      %v1312 = vsel %vm845, %v1247, 0
      %v1315 = vsel %vm845, %v1248, 0
      %v1318 = vsel %vm845, %v1249, 0
      %v1321 = vsel %vm845, %v1250, 0
      %v1324 = vsel %vm845, %v1251, 0
      %v1327 = vsel %vm845, %v1252, 0
      %v1330 = vsel %vm845, %v1253, 0
      %v1333 = vsel %vm845, %v1254, 0
      %v1336 = vsel %vm845, %v1255, 0
      %v1339 = vsel %vm845, %v1256, 0
      %v1342 = vsel %vm845, %v1257, 0
      %v1345 = vsel %vm845, %v1258, 0
      %v1348 = vsel %vm845, %v1259, 0
      %v1351 = vsel %vm845, %v1260, 0
      %v1354 = vsel %vm845, %v1261, 0
      %v1357 = vsel %vm845, %v1262, 0
      %v1360 = vsel %vm845, %v1263, 0
      %v1363 = vsel %vm845, %v1264, 0
      %v1366 = vsel %vm845, %v1265, 0
      %v1369 = vsel %vm845, %v1266, 0
      %v1372 = vsel %vm845, %v1267, 0
      %v1375 = vsel %vm845, %v1268, 0
      %v1378 = vsel %vm845, %v1269, 0
      %v1381 = vsel %vm845, %v1270, 0
      %v1384 = vsel %vm845, %v1271, 0
      %v1387 = vsel %vm845, %v1272, 0
      %v1390 = vsel %vm845, %v1273, 0
      %v1393 = vsel %vm845, %v1274, 0
      %v1396 = vsel %vm845, %v1275, 0
      %v1399 = vsel %vm845, %v1276, 0
      %v1402 = vsel %vm845, %v1277, 0
      %v1405 = vsel %vm845, %v1278, 0
      %v1408 = vsel %vm845, %v1279, 0
      %v1411 = vsel %vm845, %v1280, 0
      %v1414 = vsel %vm845, %v1281, 0
      %v1417 = vsel %vm845, %v1282, 0
      %v1420 = vsel %vm845, %v1283, 0
      %v1423 = vsel %vm845, %v1284, 0
      %v1426 = vsel %vm845, %v1285, 0
      %v1429 = vsel %vm845, %v1286, 0
      %v1432 = vsel %vm845, %v1287, 0
      %v1435 = vsel %vm845, %v1288, 0
      %v1438 = vsel %vm845, %v1289, 0
      %v1441 = vsel %vm845, %v1290, 0
      %v1444 = vsel %vm845, %v1291, 0
      %v1447 = vsel %vm845, %v1292, 0
      %v1450 = vsel %vm845, %v1293, 0
      %v1453 = vsel %vm845, %v1294, 0
      %v1456 = vsel %vm845, %v1295, 0
      %v1459 = vsel %vm845, %v1296, 0
      %v1462 = vsel %vm845, %v1297, 0
      %v1465 = vsel %vm845, %v1298, 0
      %v1468 = vsel %vm845, %v1299, 0
      %v1471 = vsel %vm845, %v1300, 0
      %v1474 = vsel %vm845, %v1301, 0
      %v1477 = vsel %vm845, %v1302, 0
      %v1480 = vsel %vm845, %v1303, 0
      %v1483 = vsel %vm845, %v1304, 0
      %v1486 = vsel %vm845, %v1305, 0
      %v1489 = vsel %vm845, %v1306, 0
      %v1492 = vsel %vm845, %v1307, 0
      %v1495 = vsel %vm845, %v1308, 0
      %v1498 = vsel %vm845, %v1309, 0
      %v1501 = vsel %vm845, %v1310, 0
      %1503 = vmatpush.msra.mxu0 0.0
      %1504 = vmatpush.msra.mxu0 0.0
      %1505 = vmatpush.msra.mxu0 0.0
      %1506 = vmatpush.msra.mxu0 0.0
      %1507 = vmatpush.msra.mxu0 0.0
      %1508 = vmatpush.msra.mxu0 0.0
      %1509 = vmatpush.msra.mxu0 0.0
      %1510 = vmatpush.msra.mxu0 0.0
      %1511 = vmatpush.msra.mxu0 %v298
      %1512 = vmatpush.msra.mxu0 %v297
      %1513 = vmatpush.msra.mxu0 %v296
      %1514 = vmatpush.msra.mxu0 %v295
      %1515 = vmatpush.msra.mxu0 %v294
      %1516 = vmatpush.msra.mxu0 %v293
      %1517 = vmatpush.msra.mxu0 %v292
      %1518 = vmatpush.msra.mxu0 %v291
      %1519 = vmatmul.f32.gmra.mxu0 %v1312
      %v1520 = vpop.f32.mrf.mxu0
      %v1521 = vadd.f32 %v309, %v1520
      %1522 = vmatmul.f32.gmra.mxu0 %v1315
      %v1523 = vpop.f32.mrf.mxu0
      %v1524 = vadd.f32 %v309, %v1523
      %1525 = vmatmul.f32.gmra.mxu0 %v1318
      %v1526 = vpop.f32.mrf.mxu0
      %v1527 = vadd.f32 %v309, %v1526
      %1528 = vmatmul.f32.gmra.mxu0 %v1321
      %v1529 = vpop.f32.mrf.mxu0
      %v1530 = vadd.f32 %v309, %v1529
      %1531 = vmatmul.f32.gmra.mxu0 %v1324
      %v1532 = vpop.f32.mrf.mxu0
      %v1533 = vadd.f32 %v309, %v1532
      %1534 = vmatmul.f32.gmra.mxu0 %v1327
      %v1535 = vpop.f32.mrf.mxu0
      %v1536 = vadd.f32 %v309, %v1535
      %1537 = vmatmul.f32.gmra.mxu0 %v1330
      %v1538 = vpop.f32.mrf.mxu0
      %v1539 = vadd.f32 %v309, %v1538
      %1540 = vmatmul.f32.gmra.mxu0 %v1333
      %v1541 = vpop.f32.mrf.mxu0
      %v1542 = vadd.f32 %v309, %v1541
      %1543 = vmatmul.f32.gmra.mxu0 %v1336
      %v1544 = vpop.f32.mrf.mxu0
      %v1545 = vadd.f32 %v309, %v1544
      %1546 = vmatmul.f32.gmra.mxu0 %v1339
      %v1547 = vpop.f32.mrf.mxu0
      %v1548 = vadd.f32 %v309, %v1547
      %1549 = vmatmul.f32.gmra.mxu0 %v1342
      %v1550 = vpop.f32.mrf.mxu0
      %v1551 = vadd.f32 %v309, %v1550
      %1552 = vmatmul.f32.gmra.mxu0 %v1345
      %v1553 = vpop.f32.mrf.mxu0
      %v1554 = vadd.f32 %v309, %v1553
      %1555 = vmatmul.f32.gmra.mxu0 %v1348
      %v1556 = vpop.f32.mrf.mxu0
      %v1557 = vadd.f32 %v309, %v1556
      %1558 = vmatmul.f32.gmra.mxu0 %v1351
      %v1559 = vpop.f32.mrf.mxu0
      %v1560 = vadd.f32 %v309, %v1559
      %1561 = vmatmul.f32.gmra.mxu0 %v1354
      %v1562 = vpop.f32.mrf.mxu0
      %v1563 = vadd.f32 %v309, %v1562
      %1564 = vmatmul.f32.gmra.mxu0 %v1357
      %v1565 = vpop.f32.mrf.mxu0
      %v1566 = vadd.f32 %v309, %v1565
      %1567 = vmatmul.f32.gmra.mxu0 %v1360
      %v1568 = vpop.f32.mrf.mxu0
      %v1569 = vadd.f32 %v309, %v1568
      %1570 = vmatmul.f32.gmra.mxu0 %v1363
      %v1571 = vpop.f32.mrf.mxu0
      %v1572 = vadd.f32 %v309, %v1571
      %1573 = vmatmul.f32.gmra.mxu0 %v1366
      %v1574 = vpop.f32.mrf.mxu0
      %v1575 = vadd.f32 %v309, %v1574
      %1576 = vmatmul.f32.gmra.mxu0 %v1369
      %v1577 = vpop.f32.mrf.mxu0
      %v1578 = vadd.f32 %v309, %v1577
      %1579 = vmatmul.f32.gmra.mxu0 %v1372
      %v1580 = vpop.f32.mrf.mxu0
      %v1581 = vadd.f32 %v309, %v1580
      %1582 = vmatmul.f32.gmra.mxu0 %v1375
      %v1583 = vpop.f32.mrf.mxu0
      %v1584 = vadd.f32 %v309, %v1583
      %1585 = vmatmul.f32.gmra.mxu0 %v1378
      %v1586 = vpop.f32.mrf.mxu0
      %v1587 = vadd.f32 %v309, %v1586
      %1588 = vmatmul.f32.gmra.mxu0 %v1381
      %v1589 = vpop.f32.mrf.mxu0
      %v1590 = vadd.f32 %v309, %v1589
      %1591 = vmatmul.f32.gmra.mxu0 %v1384
      %v1592 = vpop.f32.mrf.mxu0
      %v1593 = vadd.f32 %v309, %v1592
      %1594 = vmatmul.f32.gmra.mxu0 %v1387
      %v1595 = vpop.f32.mrf.mxu0
      %v1596 = vadd.f32 %v309, %v1595
      %1597 = vmatmul.f32.gmra.mxu0 %v1390
      %v1598 = vpop.f32.mrf.mxu0
      %v1599 = vadd.f32 %v309, %v1598
      %1600 = vmatmul.f32.gmra.mxu0 %v1393
      %v1601 = vpop.f32.mrf.mxu0
      %v1602 = vadd.f32 %v309, %v1601
      %1603 = vmatmul.f32.gmra.mxu0 %v1396
      %v1604 = vpop.f32.mrf.mxu0
      %v1605 = vadd.f32 %v309, %v1604
      %1606 = vmatmul.f32.gmra.mxu0 %v1399
      %v1607 = vpop.f32.mrf.mxu0
      %v1608 = vadd.f32 %v309, %v1607
      %1609 = vmatmul.f32.gmra.mxu0 %v1402
      %v1610 = vpop.f32.mrf.mxu0
      %v1611 = vadd.f32 %v309, %v1610
      %1612 = vmatmul.f32.gmra.mxu0 %v1405
      %v1613 = vpop.f32.mrf.mxu0
      %v1614 = vadd.f32 %v309, %v1613
      %1615 = vmatmul.f32.gmra.mxu0 %v1408
      %v1616 = vpop.f32.mrf.mxu0
      %v1617 = vadd.f32 %v309, %v1616
      %1618 = vmatmul.f32.gmra.mxu0 %v1411
      %v1619 = vpop.f32.mrf.mxu0
      %v1620 = vadd.f32 %v309, %v1619
      %1621 = vmatmul.f32.gmra.mxu0 %v1414
      %v1622 = vpop.f32.mrf.mxu0
      %v1623 = vadd.f32 %v309, %v1622
      %1624 = vmatmul.f32.gmra.mxu0 %v1417
      %v1625 = vpop.f32.mrf.mxu0
      %v1626 = vadd.f32 %v309, %v1625
      %1627 = vmatmul.f32.gmra.mxu0 %v1420
      %v1628 = vpop.f32.mrf.mxu0
      %v1629 = vadd.f32 %v309, %v1628
      %1630 = vmatmul.f32.gmra.mxu0 %v1423
      %v1631 = vpop.f32.mrf.mxu0
      %v1632 = vadd.f32 %v309, %v1631
      %1633 = vmatmul.f32.gmra.mxu0 %v1426
      %v1634 = vpop.f32.mrf.mxu0
      %v1635 = vadd.f32 %v309, %v1634
      %1636 = vmatmul.f32.gmra.mxu0 %v1429
      %v1637 = vpop.f32.mrf.mxu0
      %v1638 = vadd.f32 %v309, %v1637
      %1639 = vmatmul.f32.gmra.mxu0 %v1432
      %v1640 = vpop.f32.mrf.mxu0
      %v1641 = vadd.f32 %v309, %v1640
      %1642 = vmatmul.f32.gmra.mxu0 %v1435
      %v1643 = vpop.f32.mrf.mxu0
      %v1644 = vadd.f32 %v309, %v1643
      %1645 = vmatmul.f32.gmra.mxu0 %v1438
      %v1646 = vpop.f32.mrf.mxu0
      %v1647 = vadd.f32 %v309, %v1646
      %1648 = vmatmul.f32.gmra.mxu0 %v1441
      %v1649 = vpop.f32.mrf.mxu0
      %v1650 = vadd.f32 %v309, %v1649
      %1651 = vmatmul.f32.gmra.mxu0 %v1444
      %v1652 = vpop.f32.mrf.mxu0
      %v1653 = vadd.f32 %v309, %v1652
      %1654 = vmatmul.f32.gmra.mxu0 %v1447
      %v1655 = vpop.f32.mrf.mxu0
      %v1656 = vadd.f32 %v309, %v1655
      %1657 = vmatmul.f32.gmra.mxu0 %v1450
      %v1658 = vpop.f32.mrf.mxu0
      %v1659 = vadd.f32 %v309, %v1658
      %1660 = vmatmul.f32.gmra.mxu0 %v1453
      %v1661 = vpop.f32.mrf.mxu0
      %v1662 = vadd.f32 %v309, %v1661
      %1663 = vmatmul.f32.gmra.mxu0 %v1456
      %v1664 = vpop.f32.mrf.mxu0
      %v1665 = vadd.f32 %v309, %v1664
      %1666 = vmatmul.f32.gmra.mxu0 %v1459
      %v1667 = vpop.f32.mrf.mxu0
      %v1668 = vadd.f32 %v309, %v1667
      %1669 = vmatmul.f32.gmra.mxu0 %v1462
      %v1670 = vpop.f32.mrf.mxu0
      %v1671 = vadd.f32 %v309, %v1670
      %1672 = vmatmul.f32.gmra.mxu0 %v1465
      %v1673 = vpop.f32.mrf.mxu0
      %v1674 = vadd.f32 %v309, %v1673
      %1675 = vmatmul.f32.gmra.mxu0 %v1468
      %v1676 = vpop.f32.mrf.mxu0
      %v1677 = vadd.f32 %v309, %v1676
      %1678 = vmatmul.f32.gmra.mxu0 %v1471
      %v1679 = vpop.f32.mrf.mxu0
      %v1680 = vadd.f32 %v309, %v1679
      %1681 = vmatmul.f32.gmra.mxu0 %v1474
      %v1682 = vpop.f32.mrf.mxu0
      %v1683 = vadd.f32 %v309, %v1682
      %1684 = vmatmul.f32.gmra.mxu0 %v1477
      %v1685 = vpop.f32.mrf.mxu0
      %v1686 = vadd.f32 %v309, %v1685
      %1687 = vmatmul.f32.gmra.mxu0 %v1480
      %v1688 = vpop.f32.mrf.mxu0
      %v1689 = vadd.f32 %v309, %v1688
      %1690 = vmatmul.f32.gmra.mxu0 %v1483
      %v1691 = vpop.f32.mrf.mxu0
      %v1692 = vadd.f32 %v309, %v1691
      %1693 = vmatmul.f32.gmra.mxu0 %v1486
      %v1694 = vpop.f32.mrf.mxu0
      %v1695 = vadd.f32 %v309, %v1694
      %1696 = vmatmul.f32.gmra.mxu0 %v1489
      %v1697 = vpop.f32.mrf.mxu0
      %v1698 = vadd.f32 %v309, %v1697
      %1699 = vmatmul.f32.gmra.mxu0 %v1492
      %v1700 = vpop.f32.mrf.mxu0
      %v1701 = vadd.f32 %v309, %v1700
      %1702 = vmatmul.f32.gmra.mxu0 %v1495
      %v1703 = vpop.f32.mrf.mxu0
      %v1704 = vadd.f32 %v309, %v1703
      %1705 = vmatmul.f32.gmra.mxu0 %v1498
      %v1706 = vpop.f32.mrf.mxu0
      %v1707 = vadd.f32 %v309, %v1706
      %1708 = vmatmul.f32.gmra.mxu0 %v1501
      %v1709 = vpop.f32.mrf.mxu0
      %v1710 = vadd.f32 %v309, %v1709
      %1711 = vdwg.mxu0
      %1712 = vst.msk [vmem:[%s280] sm:$0xff] %vm375, %v1521
      %1713 = vst.msk [vmem:[%s280 + $0x8] sm:$0xff] %vm375, %v1524
      %1714 = vst.msk [vmem:[%s280 + $0x10] sm:$0xff] %vm375, %v1527
      %1715 = vst.msk [vmem:[%s280 + $0x18] sm:$0xff] %vm375, %v1530
      %1716 = vst.msk [vmem:[%s280 + $0x20] sm:$0xff] %vm375, %v1533
      %1717 = vst.msk [vmem:[%s280 + $0x28] sm:$0xff] %vm375, %v1536
      %1718 = vst.msk [vmem:[%s280 + $0x30] sm:$0xff] %vm375, %v1539
      %1719 = vst.msk [vmem:[%s280 + $0x38] sm:$0xff] %vm375, %v1542
      %1720 = vst.msk [vmem:[%s280 + $0x40] sm:$0xff] %vm375, %v1545
      %1721 = vst.msk [vmem:[%s280 + $0x48] sm:$0xff] %vm375, %v1548
      %1722 = vst.msk [vmem:[%s280 + $0x50] sm:$0xff] %vm375, %v1551
      %1723 = vst.msk [vmem:[%s280 + $0x58] sm:$0xff] %vm375, %v1554
      %1724 = vst.msk [vmem:[%s280 + $0x60] sm:$0xff] %vm375, %v1557
      %1725 = vst.msk [vmem:[%s280 + $0x68] sm:$0xff] %vm375, %v1560
      %1726 = vst.msk [vmem:[%s280 + $0x70] sm:$0xff] %vm375, %v1563
      %1727 = vst.msk [vmem:[%s280 + $0x78] sm:$0xff] %vm375, %v1566
      %1728 = vst.msk [vmem:[%s280 + $0x80] sm:$0xff] %vm375, %v1569
      %1729 = vst.msk [vmem:[%s280 + $0x88] sm:$0xff] %vm375, %v1572
      %1730 = vst.msk [vmem:[%s280 + $0x90] sm:$0xff] %vm375, %v1575
      %1731 = vst.msk [vmem:[%s280 + $0x98] sm:$0xff] %vm375, %v1578
      %1732 = vst.msk [vmem:[%s280 + $0xa0] sm:$0xff] %vm375, %v1581
      %1733 = vst.msk [vmem:[%s280 + $0xa8] sm:$0xff] %vm375, %v1584
      %1734 = vst.msk [vmem:[%s280 + $0xb0] sm:$0xff] %vm375, %v1587
      %1735 = vst.msk [vmem:[%s280 + $0xb8] sm:$0xff] %vm375, %v1590
      %1736 = vst.msk [vmem:[%s280 + $0xc0] sm:$0xff] %vm375, %v1593
      %1737 = vst.msk [vmem:[%s280 + $0xc8] sm:$0xff] %vm375, %v1596
      %1738 = vst.msk [vmem:[%s280 + $0xd0] sm:$0xff] %vm375, %v1599
      %1739 = vst.msk [vmem:[%s280 + $0xd8] sm:$0xff] %vm375, %v1602
      %1740 = vst.msk [vmem:[%s280 + $0xe0] sm:$0xff] %vm375, %v1605
      %1741 = vst.msk [vmem:[%s280 + $0xe8] sm:$0xff] %vm375, %v1608
      %1742 = vst.msk [vmem:[%s280 + $0xf0] sm:$0xff] %vm375, %v1611
      %1743 = vst.msk [vmem:[%s280 + $0xf8] sm:$0xff] %vm375, %v1614
      %1744 = vst.msk [vmem:[%s280 + $0x100] sm:$0xff] %vm375, %v1617
      %1745 = vst.msk [vmem:[%s280 + $0x108] sm:$0xff] %vm375, %v1620
      %1746 = vst.msk [vmem:[%s280 + $0x110] sm:$0xff] %vm375, %v1623
      %1747 = vst.msk [vmem:[%s280 + $0x118] sm:$0xff] %vm375, %v1626
      %1748 = vst.msk [vmem:[%s280 + $0x120] sm:$0xff] %vm375, %v1629
      %1749 = vst.msk [vmem:[%s280 + $0x128] sm:$0xff] %vm375, %v1632
      %1750 = vst.msk [vmem:[%s280 + $0x130] sm:$0xff] %vm375, %v1635
      %1751 = vst.msk [vmem:[%s280 + $0x138] sm:$0xff] %vm375, %v1638
      %1752 = vst.msk [vmem:[%s280 + $0x140] sm:$0xff] %vm375, %v1641
      %1753 = vst.msk [vmem:[%s280 + $0x148] sm:$0xff] %vm375, %v1644
      %1754 = vst.msk [vmem:[%s280 + $0x150] sm:$0xff] %vm375, %v1647
      %1755 = vst.msk [vmem:[%s280 + $0x158] sm:$0xff] %vm375, %v1650
      %1756 = vst.msk [vmem:[%s280 + $0x160] sm:$0xff] %vm375, %v1653
      %1757 = vst.msk [vmem:[%s280 + $0x168] sm:$0xff] %vm375, %v1656
      %1758 = vst.msk [vmem:[%s280 + $0x170] sm:$0xff] %vm375, %v1659
      %1759 = vst.msk [vmem:[%s280 + $0x178] sm:$0xff] %vm375, %v1662
      %1760 = vst.msk [vmem:[%s280 + $0x180] sm:$0xff] %vm375, %v1665
      %1761 = vst.msk [vmem:[%s280 + $0x188] sm:$0xff] %vm375, %v1668
      %1762 = vst.msk [vmem:[%s280 + $0x190] sm:$0xff] %vm375, %v1671
      %1763 = vst.msk [vmem:[%s280 + $0x198] sm:$0xff] %vm375, %v1674
      %1764 = vst.msk [vmem:[%s280 + $0x1a0] sm:$0xff] %vm375, %v1677
      %1765 = vst.msk [vmem:[%s280 + $0x1a8] sm:$0xff] %vm375, %v1680
      %1766 = vst.msk [vmem:[%s280 + $0x1b0] sm:$0xff] %vm375, %v1683
      %1767 = vst.msk [vmem:[%s280 + $0x1b8] sm:$0xff] %vm375, %v1686
      %1768 = vst.msk [vmem:[%s280 + $0x1c0] sm:$0xff] %vm375, %v1689
      %1769 = vst.msk [vmem:[%s280 + $0x1c8] sm:$0xff] %vm375, %v1692
      %1770 = vst.msk [vmem:[%s280 + $0x1d0] sm:$0xff] %vm375, %v1695
      %1771 = vst.msk [vmem:[%s280 + $0x1d8] sm:$0xff] %vm375, %v1698
      %1772 = vst.msk [vmem:[%s280 + $0x1e0] sm:$0xff] %vm375, %v1701
      %1773 = vst.msk [vmem:[%s280 + $0x1e8] sm:$0xff] %vm375, %v1704
      %1774 = vst.msk [vmem:[%s280 + $0x1f0] sm:$0xff] %vm375, %v1707
      %1775 = vst.msk [vmem:[%s280 + $0x1f8] sm:$0xff] %vm375, %v1710
      %s1776 = scalar_lea.vmem %s274, 512
      %v1777 = vld [vmem:[%s1776] sm:$0xff]
      %v1778 = vld [vmem:[%s1776 + $0x8] sm:$0xff]
      %v1779 = vld [vmem:[%s1776 + $0x10] sm:$0xff]
      %v1780 = vld [vmem:[%s1776 + $0x18] sm:$0xff]
      %v1781 = vld [vmem:[%s1776 + $0x20] sm:$0xff]
      %v1782 = vld [vmem:[%s1776 + $0x28] sm:$0xff]
      %v1783 = vld [vmem:[%s1776 + $0x30] sm:$0xff]
      %v1784 = vld [vmem:[%s1776 + $0x38] sm:$0xff]
      %v1785 = vld [vmem:[%s1776 + $0x40] sm:$0xff]
      %v1786 = vld [vmem:[%s1776 + $0x48] sm:$0xff]
      %v1787 = vld [vmem:[%s1776 + $0x50] sm:$0xff]
      %v1788 = vld [vmem:[%s1776 + $0x58] sm:$0xff]
      %v1789 = vld [vmem:[%s1776 + $0x60] sm:$0xff]
      %v1790 = vld [vmem:[%s1776 + $0x68] sm:$0xff]
      %v1791 = vld [vmem:[%s1776 + $0x70] sm:$0xff]
      %v1792 = vld [vmem:[%s1776 + $0x78] sm:$0xff]
      %v1793 = vld [vmem:[%s1776 + $0x80] sm:$0xff]
      %v1794 = vld [vmem:[%s1776 + $0x88] sm:$0xff]
      %v1795 = vld [vmem:[%s1776 + $0x90] sm:$0xff]
      %v1796 = vld [vmem:[%s1776 + $0x98] sm:$0xff]
      %v1797 = vld [vmem:[%s1776 + $0xa0] sm:$0xff]
      %v1798 = vld [vmem:[%s1776 + $0xa8] sm:$0xff]
      %v1799 = vld [vmem:[%s1776 + $0xb0] sm:$0xff]
      %v1800 = vld [vmem:[%s1776 + $0xb8] sm:$0xff]
      %v1801 = vld [vmem:[%s1776 + $0xc0] sm:$0xff]
      %v1802 = vld [vmem:[%s1776 + $0xc8] sm:$0xff]
      %v1803 = vld [vmem:[%s1776 + $0xd0] sm:$0xff]
      %v1804 = vld [vmem:[%s1776 + $0xd8] sm:$0xff]
      %v1805 = vld [vmem:[%s1776 + $0xe0] sm:$0xff]
      %v1806 = vld [vmem:[%s1776 + $0xe8] sm:$0xff]
      %v1807 = vld [vmem:[%s1776 + $0xf0] sm:$0xff]
      %v1808 = vld [vmem:[%s1776 + $0xf8] sm:$0xff]
      %v1809 = vld [vmem:[%s1776 + $0x100] sm:$0xff]
      %v1810 = vld [vmem:[%s1776 + $0x108] sm:$0xff]
      %v1811 = vld [vmem:[%s1776 + $0x110] sm:$0xff]
      %v1812 = vld [vmem:[%s1776 + $0x118] sm:$0xff]
      %v1813 = vld [vmem:[%s1776 + $0x120] sm:$0xff]
      %v1814 = vld [vmem:[%s1776 + $0x128] sm:$0xff]
      %v1815 = vld [vmem:[%s1776 + $0x130] sm:$0xff]
      %v1816 = vld [vmem:[%s1776 + $0x138] sm:$0xff]
      %v1817 = vld [vmem:[%s1776 + $0x140] sm:$0xff]
      %v1818 = vld [vmem:[%s1776 + $0x148] sm:$0xff]
      %v1819 = vld [vmem:[%s1776 + $0x150] sm:$0xff]
      %v1820 = vld [vmem:[%s1776 + $0x158] sm:$0xff]
      %v1821 = vld [vmem:[%s1776 + $0x160] sm:$0xff]
      %v1822 = vld [vmem:[%s1776 + $0x168] sm:$0xff]
      %v1823 = vld [vmem:[%s1776 + $0x170] sm:$0xff]
      %v1824 = vld [vmem:[%s1776 + $0x178] sm:$0xff]
      %v1825 = vld [vmem:[%s1776 + $0x180] sm:$0xff]
      %v1826 = vld [vmem:[%s1776 + $0x188] sm:$0xff]
      %v1827 = vld [vmem:[%s1776 + $0x190] sm:$0xff]
      %v1828 = vld [vmem:[%s1776 + $0x198] sm:$0xff]
      %v1829 = vld [vmem:[%s1776 + $0x1a0] sm:$0xff]
      %v1830 = vld [vmem:[%s1776 + $0x1a8] sm:$0xff]
      %v1831 = vld [vmem:[%s1776 + $0x1b0] sm:$0xff]
      %v1832 = vld [vmem:[%s1776 + $0x1b8] sm:$0xff]
      %v1833 = vld [vmem:[%s1776 + $0x1c0] sm:$0xff]
      %v1834 = vld [vmem:[%s1776 + $0x1c8] sm:$0xff]
      %v1835 = vld [vmem:[%s1776 + $0x1d0] sm:$0xff]
      %v1836 = vld [vmem:[%s1776 + $0x1d8] sm:$0xff]
      %v1837 = vld [vmem:[%s1776 + $0x1e0] sm:$0xff]
      %v1838 = vld [vmem:[%s1776 + $0x1e8] sm:$0xff]
      %v1839 = vld [vmem:[%s1776 + $0x1f0] sm:$0xff]
      %v1840 = vld [vmem:[%s1776 + $0x1f8] sm:$0xff]
      %v1842 = vsel %vm375, %v1777, 0
      %v1845 = vsel %vm375, %v1778, 0
      %v1848 = vsel %vm375, %v1779, 0
      %v1851 = vsel %vm375, %v1780, 0
      %v1854 = vsel %vm375, %v1781, 0
      %v1857 = vsel %vm375, %v1782, 0
      %v1860 = vsel %vm375, %v1783, 0
      %v1863 = vsel %vm375, %v1784, 0
      %v1866 = vsel %vm375, %v1785, 0
      %v1869 = vsel %vm375, %v1786, 0
      %v1872 = vsel %vm375, %v1787, 0
      %v1875 = vsel %vm375, %v1788, 0
      %v1878 = vsel %vm375, %v1789, 0
      %v1881 = vsel %vm375, %v1790, 0
      %v1884 = vsel %vm375, %v1791, 0
      %v1887 = vsel %vm375, %v1792, 0
      %v1890 = vsel %vm375, %v1793, 0
      %v1893 = vsel %vm375, %v1794, 0
      %v1896 = vsel %vm375, %v1795, 0
      %v1899 = vsel %vm375, %v1796, 0
      %v1902 = vsel %vm375, %v1797, 0
      %v1905 = vsel %vm375, %v1798, 0
      %v1908 = vsel %vm375, %v1799, 0
      %v1911 = vsel %vm375, %v1800, 0
      %v1914 = vsel %vm375, %v1801, 0
      %v1917 = vsel %vm375, %v1802, 0
      %v1920 = vsel %vm375, %v1803, 0
      %v1923 = vsel %vm375, %v1804, 0
      %v1926 = vsel %vm375, %v1805, 0
      %v1929 = vsel %vm375, %v1806, 0
      %v1932 = vsel %vm375, %v1807, 0
      %v1935 = vsel %vm375, %v1808, 0
      %v1938 = vsel %vm375, %v1809, 0
      %v1941 = vsel %vm375, %v1810, 0
      %v1944 = vsel %vm375, %v1811, 0
      %v1947 = vsel %vm375, %v1812, 0
      %v1950 = vsel %vm375, %v1813, 0
      %v1953 = vsel %vm375, %v1814, 0
      %v1956 = vsel %vm375, %v1815, 0
      %v1959 = vsel %vm375, %v1816, 0
      %v1962 = vsel %vm375, %v1817, 0
      %v1965 = vsel %vm375, %v1818, 0
      %v1968 = vsel %vm375, %v1819, 0
      %v1971 = vsel %vm375, %v1820, 0
      %v1974 = vsel %vm375, %v1821, 0
      %v1977 = vsel %vm375, %v1822, 0
      %v1980 = vsel %vm375, %v1823, 0
      %v1983 = vsel %vm375, %v1824, 0
      %v1986 = vsel %vm375, %v1825, 0
      %v1989 = vsel %vm375, %v1826, 0
      %v1992 = vsel %vm375, %v1827, 0
      %v1995 = vsel %vm375, %v1828, 0
      %v1998 = vsel %vm375, %v1829, 0
      %v2001 = vsel %vm375, %v1830, 0
      %v2004 = vsel %vm375, %v1831, 0
      %v2007 = vsel %vm375, %v1832, 0
      %v2010 = vsel %vm375, %v1833, 0
      %v2013 = vsel %vm375, %v1834, 0
      %v2016 = vsel %vm375, %v1835, 0
      %v2019 = vsel %vm375, %v1836, 0
      %v2022 = vsel %vm375, %v1837, 0
      %v2025 = vsel %vm375, %v1838, 0
      %v2028 = vsel %vm375, %v1839, 0
      %v2031 = vsel %vm375, %v1840, 0
      %2033 = vmatpush.msra.mxu0 0.0
      %2034 = vmatpush.msra.mxu0 0.0
      %2035 = vmatpush.msra.mxu0 0.0
      %2036 = vmatpush.msra.mxu0 0.0
      %2037 = vmatpush.msra.mxu0 0.0
      %2038 = vmatpush.msra.mxu0 0.0
      %2039 = vmatpush.msra.mxu0 0.0
      %2040 = vmatpush.msra.mxu0 0.0
      %2041 = vmatpush.msra.mxu0 0.0
      %2042 = vmatpush.msra.mxu0 0.0
      %2043 = vmatpush.msra.mxu0 0.0
      %2044 = vmatpush.msra.mxu0 0.0
      %2045 = vmatpush.msra.mxu0 0.0
      %2046 = vmatpush.msra.mxu0 0.0
      %2047 = vmatpush.msra.mxu0 0.0
      %2048 = vmatpush.msra.mxu0 %v570
      %2049 = vmatmul.f32.gmra.mxu0 %v1842
      %v2050 = vpop.f32.mrf.mxu0
      %v2051 = vadd.f32 %v301, %v2050
      %2052 = vmatmul.f32.gmra.mxu0 %v1845
      %v2053 = vpop.f32.mrf.mxu0
      %v2054 = vadd.f32 %v301, %v2053
      %2055 = vmatmul.f32.gmra.mxu0 %v1848
      %v2056 = vpop.f32.mrf.mxu0
      %v2057 = vadd.f32 %v301, %v2056
      %2058 = vmatmul.f32.gmra.mxu0 %v1851
      %v2059 = vpop.f32.mrf.mxu0
      %v2060 = vadd.f32 %v301, %v2059
      %2061 = vmatmul.f32.gmra.mxu0 %v1854
      %v2062 = vpop.f32.mrf.mxu0
      %v2063 = vadd.f32 %v301, %v2062
      %2064 = vmatmul.f32.gmra.mxu0 %v1857
      %v2065 = vpop.f32.mrf.mxu0
      %v2066 = vadd.f32 %v301, %v2065
      %2067 = vmatmul.f32.gmra.mxu0 %v1860
      %v2068 = vpop.f32.mrf.mxu0
      %v2069 = vadd.f32 %v301, %v2068
      %2070 = vmatmul.f32.gmra.mxu0 %v1863
      %v2071 = vpop.f32.mrf.mxu0
      %v2072 = vadd.f32 %v301, %v2071
      %2073 = vmatmul.f32.gmra.mxu0 %v1866
      %v2074 = vpop.f32.mrf.mxu0
      %v2075 = vadd.f32 %v301, %v2074
      %2076 = vmatmul.f32.gmra.mxu0 %v1869
      %v2077 = vpop.f32.mrf.mxu0
      %v2078 = vadd.f32 %v301, %v2077
      %2079 = vmatmul.f32.gmra.mxu0 %v1872
      %v2080 = vpop.f32.mrf.mxu0
      %v2081 = vadd.f32 %v301, %v2080
      %2082 = vmatmul.f32.gmra.mxu0 %v1875
      %v2083 = vpop.f32.mrf.mxu0
      %v2084 = vadd.f32 %v301, %v2083
      %2085 = vmatmul.f32.gmra.mxu0 %v1878
      %v2086 = vpop.f32.mrf.mxu0
      %v2087 = vadd.f32 %v301, %v2086
      %2088 = vmatmul.f32.gmra.mxu0 %v1881
      %v2089 = vpop.f32.mrf.mxu0
      %v2090 = vadd.f32 %v301, %v2089
      %2091 = vmatmul.f32.gmra.mxu0 %v1884
      %v2092 = vpop.f32.mrf.mxu0
      %v2093 = vadd.f32 %v301, %v2092
      %2094 = vmatmul.f32.gmra.mxu0 %v1887
      %v2095 = vpop.f32.mrf.mxu0
      %v2096 = vadd.f32 %v301, %v2095
      %2097 = vmatmul.f32.gmra.mxu0 %v1890
      %v2098 = vpop.f32.mrf.mxu0
      %v2099 = vadd.f32 %v301, %v2098
      %2100 = vmatmul.f32.gmra.mxu0 %v1893
      %v2101 = vpop.f32.mrf.mxu0
      %v2102 = vadd.f32 %v301, %v2101
      %2103 = vmatmul.f32.gmra.mxu0 %v1896
      %v2104 = vpop.f32.mrf.mxu0
      %v2105 = vadd.f32 %v301, %v2104
      %2106 = vmatmul.f32.gmra.mxu0 %v1899
      %v2107 = vpop.f32.mrf.mxu0
      %v2108 = vadd.f32 %v301, %v2107
      %2109 = vmatmul.f32.gmra.mxu0 %v1902
      %v2110 = vpop.f32.mrf.mxu0
      %v2111 = vadd.f32 %v301, %v2110
      %2112 = vmatmul.f32.gmra.mxu0 %v1905
      %v2113 = vpop.f32.mrf.mxu0
      %v2114 = vadd.f32 %v301, %v2113
      %2115 = vmatmul.f32.gmra.mxu0 %v1908
      %v2116 = vpop.f32.mrf.mxu0
      %v2117 = vadd.f32 %v301, %v2116
      %2118 = vmatmul.f32.gmra.mxu0 %v1911
      %v2119 = vpop.f32.mrf.mxu0
      %v2120 = vadd.f32 %v301, %v2119
      %2121 = vmatmul.f32.gmra.mxu0 %v1914
      %v2122 = vpop.f32.mrf.mxu0
      %v2123 = vadd.f32 %v301, %v2122
      %2124 = vmatmul.f32.gmra.mxu0 %v1917
      %v2125 = vpop.f32.mrf.mxu0
      %v2126 = vadd.f32 %v301, %v2125
      %2127 = vmatmul.f32.gmra.mxu0 %v1920
      %v2128 = vpop.f32.mrf.mxu0
      %v2129 = vadd.f32 %v301, %v2128
      %2130 = vmatmul.f32.gmra.mxu0 %v1923
      %v2131 = vpop.f32.mrf.mxu0
      %v2132 = vadd.f32 %v301, %v2131
      %2133 = vmatmul.f32.gmra.mxu0 %v1926
      %v2134 = vpop.f32.mrf.mxu0
      %v2135 = vadd.f32 %v301, %v2134
      %2136 = vmatmul.f32.gmra.mxu0 %v1929
      %v2137 = vpop.f32.mrf.mxu0
      %v2138 = vadd.f32 %v301, %v2137
      %2139 = vmatmul.f32.gmra.mxu0 %v1932
      %v2140 = vpop.f32.mrf.mxu0
      %v2141 = vadd.f32 %v301, %v2140
      %2142 = vmatmul.f32.gmra.mxu0 %v1935
      %v2143 = vpop.f32.mrf.mxu0
      %v2144 = vadd.f32 %v301, %v2143
      %2145 = vmatmul.f32.gmra.mxu0 %v1938
      %v2146 = vpop.f32.mrf.mxu0
      %v2147 = vadd.f32 %v301, %v2146
      %2148 = vmatmul.f32.gmra.mxu0 %v1941
      %v2149 = vpop.f32.mrf.mxu0
      %v2150 = vadd.f32 %v301, %v2149
      %2151 = vmatmul.f32.gmra.mxu0 %v1944
      %v2152 = vpop.f32.mrf.mxu0
      %v2153 = vadd.f32 %v301, %v2152
      %2154 = vmatmul.f32.gmra.mxu0 %v1947
      %v2155 = vpop.f32.mrf.mxu0
      %v2156 = vadd.f32 %v301, %v2155
      %2157 = vmatmul.f32.gmra.mxu0 %v1950
      %v2158 = vpop.f32.mrf.mxu0
      %v2159 = vadd.f32 %v301, %v2158
      %2160 = vmatmul.f32.gmra.mxu0 %v1953
      %v2161 = vpop.f32.mrf.mxu0
      %v2162 = vadd.f32 %v301, %v2161
      %2163 = vmatmul.f32.gmra.mxu0 %v1956
      %v2164 = vpop.f32.mrf.mxu0
      %v2165 = vadd.f32 %v301, %v2164
      %2166 = vmatmul.f32.gmra.mxu0 %v1959
      %v2167 = vpop.f32.mrf.mxu0
      %v2168 = vadd.f32 %v301, %v2167
      %2169 = vmatmul.f32.gmra.mxu0 %v1962
      %v2170 = vpop.f32.mrf.mxu0
      %v2171 = vadd.f32 %v301, %v2170
      %2172 = vmatmul.f32.gmra.mxu0 %v1965
      %v2173 = vpop.f32.mrf.mxu0
      %v2174 = vadd.f32 %v301, %v2173
      %2175 = vmatmul.f32.gmra.mxu0 %v1968
      %v2176 = vpop.f32.mrf.mxu0
      %v2177 = vadd.f32 %v301, %v2176
      %2178 = vmatmul.f32.gmra.mxu0 %v1971
      %v2179 = vpop.f32.mrf.mxu0
      %v2180 = vadd.f32 %v301, %v2179
      %2181 = vmatmul.f32.gmra.mxu0 %v1974
      %v2182 = vpop.f32.mrf.mxu0
      %v2183 = vadd.f32 %v301, %v2182
      %2184 = vmatmul.f32.gmra.mxu0 %v1977
      %v2185 = vpop.f32.mrf.mxu0
      %v2186 = vadd.f32 %v301, %v2185
      %2187 = vmatmul.f32.gmra.mxu0 %v1980
      %v2188 = vpop.f32.mrf.mxu0
      %v2189 = vadd.f32 %v301, %v2188
      %2190 = vmatmul.f32.gmra.mxu0 %v1983
      %v2191 = vpop.f32.mrf.mxu0
      %v2192 = vadd.f32 %v301, %v2191
      %2193 = vmatmul.f32.gmra.mxu0 %v1986
      %v2194 = vpop.f32.mrf.mxu0
      %v2195 = vadd.f32 %v301, %v2194
      %2196 = vmatmul.f32.gmra.mxu0 %v1989
      %v2197 = vpop.f32.mrf.mxu0
      %v2198 = vadd.f32 %v301, %v2197
      %2199 = vmatmul.f32.gmra.mxu0 %v1992
      %v2200 = vpop.f32.mrf.mxu0
      %v2201 = vadd.f32 %v301, %v2200
      %2202 = vmatmul.f32.gmra.mxu0 %v1995
      %v2203 = vpop.f32.mrf.mxu0
      %v2204 = vadd.f32 %v301, %v2203
      %2205 = vmatmul.f32.gmra.mxu0 %v1998
      %v2206 = vpop.f32.mrf.mxu0
      %v2207 = vadd.f32 %v301, %v2206
      %2208 = vmatmul.f32.gmra.mxu0 %v2001
      %v2209 = vpop.f32.mrf.mxu0
      %v2210 = vadd.f32 %v301, %v2209
      %2211 = vmatmul.f32.gmra.mxu0 %v2004
      %v2212 = vpop.f32.mrf.mxu0
      %v2213 = vadd.f32 %v301, %v2212
      %2214 = vmatmul.f32.gmra.mxu0 %v2007
      %v2215 = vpop.f32.mrf.mxu0
      %v2216 = vadd.f32 %v301, %v2215
      %2217 = vmatmul.f32.gmra.mxu0 %v2010
      %v2218 = vpop.f32.mrf.mxu0
      %v2219 = vadd.f32 %v301, %v2218
      %2220 = vmatmul.f32.gmra.mxu0 %v2013
      %v2221 = vpop.f32.mrf.mxu0
      %v2222 = vadd.f32 %v301, %v2221
      %2223 = vmatmul.f32.gmra.mxu0 %v2016
      %v2224 = vpop.f32.mrf.mxu0
      %v2225 = vadd.f32 %v301, %v2224
      %2226 = vmatmul.f32.gmra.mxu0 %v2019
      %v2227 = vpop.f32.mrf.mxu0
      %v2228 = vadd.f32 %v301, %v2227
      %2229 = vmatmul.f32.gmra.mxu0 %v2022
      %v2230 = vpop.f32.mrf.mxu0
      %v2231 = vadd.f32 %v301, %v2230
      %2232 = vmatmul.f32.gmra.mxu0 %v2025
      %v2233 = vpop.f32.mrf.mxu0
      %v2234 = vadd.f32 %v301, %v2233
      %2235 = vmatmul.f32.gmra.mxu0 %v2028
      %v2236 = vpop.f32.mrf.mxu0
      %v2237 = vadd.f32 %v301, %v2236
      %2238 = vmatmul.f32.gmra.mxu0 %v2031
      %v2239 = vpop.f32.mrf.mxu0
      %v2240 = vadd.f32 %v301, %v2239
      %2241 = vdwg.mxu0
      %v2242 = vmax.f32 %v2051, 0.0
      %v2243 = vmax.f32 %v2054, 0.0
      %v2244 = vmax.f32 %v2057, 0.0
      %v2245 = vmax.f32 %v2060, 0.0
      %v2246 = vmax.f32 %v2063, 0.0
      %v2247 = vmax.f32 %v2066, 0.0
      %v2248 = vmax.f32 %v2069, 0.0
      %v2249 = vmax.f32 %v2072, 0.0
      %v2250 = vmax.f32 %v2075, 0.0
      %v2251 = vmax.f32 %v2078, 0.0
      %v2252 = vmax.f32 %v2081, 0.0
      %v2253 = vmax.f32 %v2084, 0.0
      %v2254 = vmax.f32 %v2087, 0.0
      %v2255 = vmax.f32 %v2090, 0.0
      %v2256 = vmax.f32 %v2093, 0.0
      %v2257 = vmax.f32 %v2096, 0.0
      %v2258 = vmax.f32 %v2099, 0.0
      %v2259 = vmax.f32 %v2102, 0.0
      %v2260 = vmax.f32 %v2105, 0.0
      %v2261 = vmax.f32 %v2108, 0.0
      %v2262 = vmax.f32 %v2111, 0.0
      %v2263 = vmax.f32 %v2114, 0.0
      %v2264 = vmax.f32 %v2117, 0.0
      %v2265 = vmax.f32 %v2120, 0.0
      %v2266 = vmax.f32 %v2123, 0.0
      %v2267 = vmax.f32 %v2126, 0.0
      %v2268 = vmax.f32 %v2129, 0.0
      %v2269 = vmax.f32 %v2132, 0.0
      %v2270 = vmax.f32 %v2135, 0.0
      %v2271 = vmax.f32 %v2138, 0.0
      %v2272 = vmax.f32 %v2141, 0.0
      %v2273 = vmax.f32 %v2144, 0.0
      %v2274 = vmax.f32 %v2147, 0.0
      %v2275 = vmax.f32 %v2150, 0.0
      %v2276 = vmax.f32 %v2153, 0.0
      %v2277 = vmax.f32 %v2156, 0.0
      %v2278 = vmax.f32 %v2159, 0.0
      %v2279 = vmax.f32 %v2162, 0.0
      %v2280 = vmax.f32 %v2165, 0.0
      %v2281 = vmax.f32 %v2168, 0.0
      %v2282 = vmax.f32 %v2171, 0.0
      %v2283 = vmax.f32 %v2174, 0.0
      %v2284 = vmax.f32 %v2177, 0.0
      %v2285 = vmax.f32 %v2180, 0.0
      %v2286 = vmax.f32 %v2183, 0.0
      %v2287 = vmax.f32 %v2186, 0.0
      %v2288 = vmax.f32 %v2189, 0.0
      %v2289 = vmax.f32 %v2192, 0.0
      %v2290 = vmax.f32 %v2195, 0.0
      %v2291 = vmax.f32 %v2198, 0.0
      %v2292 = vmax.f32 %v2201, 0.0
      %v2293 = vmax.f32 %v2204, 0.0
      %v2294 = vmax.f32 %v2207, 0.0
      %v2295 = vmax.f32 %v2210, 0.0
      %v2296 = vmax.f32 %v2213, 0.0
      %v2297 = vmax.f32 %v2216, 0.0
      %v2298 = vmax.f32 %v2219, 0.0
      %v2299 = vmax.f32 %v2222, 0.0
      %v2300 = vmax.f32 %v2225, 0.0
      %v2301 = vmax.f32 %v2228, 0.0
      %v2302 = vmax.f32 %v2231, 0.0
      %v2303 = vmax.f32 %v2234, 0.0
      %v2304 = vmax.f32 %v2237, 0.0
      %v2305 = vmax.f32 %v2240, 0.0
      %v2307 = vsel %vm845, %v2242, 0
      %v2310 = vsel %vm845, %v2243, 0
      %v2313 = vsel %vm845, %v2244, 0
      %v2316 = vsel %vm845, %v2245, 0
      %v2319 = vsel %vm845, %v2246, 0
      %v2322 = vsel %vm845, %v2247, 0
      %v2325 = vsel %vm845, %v2248, 0
      %v2328 = vsel %vm845, %v2249, 0
      %v2331 = vsel %vm845, %v2250, 0
      %v2334 = vsel %vm845, %v2251, 0
      %v2337 = vsel %vm845, %v2252, 0
      %v2340 = vsel %vm845, %v2253, 0
      %v2343 = vsel %vm845, %v2254, 0
      %v2346 = vsel %vm845, %v2255, 0
      %v2349 = vsel %vm845, %v2256, 0
      %v2352 = vsel %vm845, %v2257, 0
      %v2355 = vsel %vm845, %v2258, 0
      %v2358 = vsel %vm845, %v2259, 0
      %v2361 = vsel %vm845, %v2260, 0
      %v2364 = vsel %vm845, %v2261, 0
      %v2367 = vsel %vm845, %v2262, 0
      %v2370 = vsel %vm845, %v2263, 0
      %v2373 = vsel %vm845, %v2264, 0
      %v2376 = vsel %vm845, %v2265, 0
      %v2379 = vsel %vm845, %v2266, 0
      %v2382 = vsel %vm845, %v2267, 0
      %v2385 = vsel %vm845, %v2268, 0
      %v2388 = vsel %vm845, %v2269, 0
      %v2391 = vsel %vm845, %v2270, 0
      %v2394 = vsel %vm845, %v2271, 0
      %v2397 = vsel %vm845, %v2272, 0
      %v2400 = vsel %vm845, %v2273, 0
      %v2403 = vsel %vm845, %v2274, 0
      %v2406 = vsel %vm845, %v2275, 0
      %v2409 = vsel %vm845, %v2276, 0
      %v2412 = vsel %vm845, %v2277, 0
      %v2415 = vsel %vm845, %v2278, 0
      %v2418 = vsel %vm845, %v2279, 0
      %v2421 = vsel %vm845, %v2280, 0
      %v2424 = vsel %vm845, %v2281, 0
      %v2427 = vsel %vm845, %v2282, 0
      %v2430 = vsel %vm845, %v2283, 0
      %v2433 = vsel %vm845, %v2284, 0
      %v2436 = vsel %vm845, %v2285, 0
      %v2439 = vsel %vm845, %v2286, 0
      %v2442 = vsel %vm845, %v2287, 0
      %v2445 = vsel %vm845, %v2288, 0
      %v2448 = vsel %vm845, %v2289, 0
      %v2451 = vsel %vm845, %v2290, 0
      %v2454 = vsel %vm845, %v2291, 0
      %v2457 = vsel %vm845, %v2292, 0
      %v2460 = vsel %vm845, %v2293, 0
      %v2463 = vsel %vm845, %v2294, 0
      %v2466 = vsel %vm845, %v2295, 0
      %v2469 = vsel %vm845, %v2296, 0
      %v2472 = vsel %vm845, %v2297, 0
      %v2475 = vsel %vm845, %v2298, 0
      %v2478 = vsel %vm845, %v2299, 0
      %v2481 = vsel %vm845, %v2300, 0
      %v2484 = vsel %vm845, %v2301, 0
      %v2487 = vsel %vm845, %v2302, 0
      %v2490 = vsel %vm845, %v2303, 0
      %v2493 = vsel %vm845, %v2304, 0
      %v2496 = vsel %vm845, %v2305, 0
      %2498 = vmatpush.msra.mxu0 0.0
      %2499 = vmatpush.msra.mxu0 0.0
      %2500 = vmatpush.msra.mxu0 0.0
      %2501 = vmatpush.msra.mxu0 0.0
      %2502 = vmatpush.msra.mxu0 0.0
      %2503 = vmatpush.msra.mxu0 0.0
      %2504 = vmatpush.msra.mxu0 0.0
      %2505 = vmatpush.msra.mxu0 0.0
      %2506 = vmatpush.msra.mxu0 %v290
      %2507 = vmatpush.msra.mxu0 %v289
      %2508 = vmatpush.msra.mxu0 %v288
      %2509 = vmatpush.msra.mxu0 %v287
      %2510 = vmatpush.msra.mxu0 %v286
      %2511 = vmatpush.msra.mxu0 %v285
      %2512 = vmatpush.msra.mxu0 %v284
      %2513 = vmatpush.msra.mxu0 %v283
      %2514 = vmatmul.f32.gmra.mxu0 %v2307
      %v2515 = vpop.f32.mrf.mxu0
      %v2516 = vadd.f32 %v305, %v2515
      %2517 = vmatmul.f32.gmra.mxu0 %v2310
      %v2518 = vpop.f32.mrf.mxu0
      %v2519 = vadd.f32 %v305, %v2518
      %2520 = vmatmul.f32.gmra.mxu0 %v2313
      %v2521 = vpop.f32.mrf.mxu0
      %v2522 = vadd.f32 %v305, %v2521
      %2523 = vmatmul.f32.gmra.mxu0 %v2316
      %v2524 = vpop.f32.mrf.mxu0
      %v2525 = vadd.f32 %v305, %v2524
      %2526 = vmatmul.f32.gmra.mxu0 %v2319
      %v2527 = vpop.f32.mrf.mxu0
      %v2528 = vadd.f32 %v305, %v2527
      %2529 = vmatmul.f32.gmra.mxu0 %v2322
      %v2530 = vpop.f32.mrf.mxu0
      %v2531 = vadd.f32 %v305, %v2530
      %2532 = vmatmul.f32.gmra.mxu0 %v2325
      %v2533 = vpop.f32.mrf.mxu0
      %v2534 = vadd.f32 %v305, %v2533
      %2535 = vmatmul.f32.gmra.mxu0 %v2328
      %v2536 = vpop.f32.mrf.mxu0
      %v2537 = vadd.f32 %v305, %v2536
      %2538 = vmatmul.f32.gmra.mxu0 %v2331
      %v2539 = vpop.f32.mrf.mxu0
      %v2540 = vadd.f32 %v305, %v2539
      %2541 = vmatmul.f32.gmra.mxu0 %v2334
      %v2542 = vpop.f32.mrf.mxu0
      %v2543 = vadd.f32 %v305, %v2542
      %2544 = vmatmul.f32.gmra.mxu0 %v2337
      %v2545 = vpop.f32.mrf.mxu0
      %v2546 = vadd.f32 %v305, %v2545
      %2547 = vmatmul.f32.gmra.mxu0 %v2340
      %v2548 = vpop.f32.mrf.mxu0
      %v2549 = vadd.f32 %v305, %v2548
      %2550 = vmatmul.f32.gmra.mxu0 %v2343
      %v2551 = vpop.f32.mrf.mxu0
      %v2552 = vadd.f32 %v305, %v2551
      %2553 = vmatmul.f32.gmra.mxu0 %v2346
      %v2554 = vpop.f32.mrf.mxu0
      %v2555 = vadd.f32 %v305, %v2554
      %2556 = vmatmul.f32.gmra.mxu0 %v2349
      %v2557 = vpop.f32.mrf.mxu0
      %v2558 = vadd.f32 %v305, %v2557
      %2559 = vmatmul.f32.gmra.mxu0 %v2352
      %v2560 = vpop.f32.mrf.mxu0
      %v2561 = vadd.f32 %v305, %v2560
      %2562 = vmatmul.f32.gmra.mxu0 %v2355
      %v2563 = vpop.f32.mrf.mxu0
      %v2564 = vadd.f32 %v305, %v2563
      %2565 = vmatmul.f32.gmra.mxu0 %v2358
      %v2566 = vpop.f32.mrf.mxu0
      %v2567 = vadd.f32 %v305, %v2566
      %2568 = vmatmul.f32.gmra.mxu0 %v2361
      %v2569 = vpop.f32.mrf.mxu0
      %v2570 = vadd.f32 %v305, %v2569
      %2571 = vmatmul.f32.gmra.mxu0 %v2364
      %v2572 = vpop.f32.mrf.mxu0
      %v2573 = vadd.f32 %v305, %v2572
      %2574 = vmatmul.f32.gmra.mxu0 %v2367
      %v2575 = vpop.f32.mrf.mxu0
      %v2576 = vadd.f32 %v305, %v2575
      %2577 = vmatmul.f32.gmra.mxu0 %v2370
      %v2578 = vpop.f32.mrf.mxu0
      %v2579 = vadd.f32 %v305, %v2578
      %2580 = vmatmul.f32.gmra.mxu0 %v2373
      %v2581 = vpop.f32.mrf.mxu0
      %v2582 = vadd.f32 %v305, %v2581
      %2583 = vmatmul.f32.gmra.mxu0 %v2376
      %v2584 = vpop.f32.mrf.mxu0
      %v2585 = vadd.f32 %v305, %v2584
      %2586 = vmatmul.f32.gmra.mxu0 %v2379
      %v2587 = vpop.f32.mrf.mxu0
      %v2588 = vadd.f32 %v305, %v2587
      %2589 = vmatmul.f32.gmra.mxu0 %v2382
      %v2590 = vpop.f32.mrf.mxu0
      %v2591 = vadd.f32 %v305, %v2590
      %2592 = vmatmul.f32.gmra.mxu0 %v2385
      %v2593 = vpop.f32.mrf.mxu0
      %v2594 = vadd.f32 %v305, %v2593
      %2595 = vmatmul.f32.gmra.mxu0 %v2388
      %v2596 = vpop.f32.mrf.mxu0
      %v2597 = vadd.f32 %v305, %v2596
      %2598 = vmatmul.f32.gmra.mxu0 %v2391
      %v2599 = vpop.f32.mrf.mxu0
      %v2600 = vadd.f32 %v305, %v2599
      %2601 = vmatmul.f32.gmra.mxu0 %v2394
      %v2602 = vpop.f32.mrf.mxu0
      %v2603 = vadd.f32 %v305, %v2602
      %2604 = vmatmul.f32.gmra.mxu0 %v2397
      %v2605 = vpop.f32.mrf.mxu0
      %v2606 = vadd.f32 %v305, %v2605
      %2607 = vmatmul.f32.gmra.mxu0 %v2400
      %v2608 = vpop.f32.mrf.mxu0
      %v2609 = vadd.f32 %v305, %v2608
      %2610 = vmatmul.f32.gmra.mxu0 %v2403
      %v2611 = vpop.f32.mrf.mxu0
      %v2612 = vadd.f32 %v305, %v2611
      %2613 = vmatmul.f32.gmra.mxu0 %v2406
      %v2614 = vpop.f32.mrf.mxu0
      %v2615 = vadd.f32 %v305, %v2614
      %2616 = vmatmul.f32.gmra.mxu0 %v2409
      %v2617 = vpop.f32.mrf.mxu0
      %v2618 = vadd.f32 %v305, %v2617
      %2619 = vmatmul.f32.gmra.mxu0 %v2412
      %v2620 = vpop.f32.mrf.mxu0
      %v2621 = vadd.f32 %v305, %v2620
      %2622 = vmatmul.f32.gmra.mxu0 %v2415
      %v2623 = vpop.f32.mrf.mxu0
      %v2624 = vadd.f32 %v305, %v2623
      %2625 = vmatmul.f32.gmra.mxu0 %v2418
      %v2626 = vpop.f32.mrf.mxu0
      %v2627 = vadd.f32 %v305, %v2626
      %2628 = vmatmul.f32.gmra.mxu0 %v2421
      %v2629 = vpop.f32.mrf.mxu0
      %v2630 = vadd.f32 %v305, %v2629
      %2631 = vmatmul.f32.gmra.mxu0 %v2424
      %v2632 = vpop.f32.mrf.mxu0
      %v2633 = vadd.f32 %v305, %v2632
      %2634 = vmatmul.f32.gmra.mxu0 %v2427
      %v2635 = vpop.f32.mrf.mxu0
      %v2636 = vadd.f32 %v305, %v2635
      %2637 = vmatmul.f32.gmra.mxu0 %v2430
      %v2638 = vpop.f32.mrf.mxu0
      %v2639 = vadd.f32 %v305, %v2638
      %2640 = vmatmul.f32.gmra.mxu0 %v2433
      %v2641 = vpop.f32.mrf.mxu0
      %v2642 = vadd.f32 %v305, %v2641
      %2643 = vmatmul.f32.gmra.mxu0 %v2436
      %v2644 = vpop.f32.mrf.mxu0
      %v2645 = vadd.f32 %v305, %v2644
      %2646 = vmatmul.f32.gmra.mxu0 %v2439
      %v2647 = vpop.f32.mrf.mxu0
      %v2648 = vadd.f32 %v305, %v2647
      %2649 = vmatmul.f32.gmra.mxu0 %v2442
      %v2650 = vpop.f32.mrf.mxu0
      %v2651 = vadd.f32 %v305, %v2650
      %2652 = vmatmul.f32.gmra.mxu0 %v2445
      %v2653 = vpop.f32.mrf.mxu0
      %v2654 = vadd.f32 %v305, %v2653
      %2655 = vmatmul.f32.gmra.mxu0 %v2448
      %v2656 = vpop.f32.mrf.mxu0
      %v2657 = vadd.f32 %v305, %v2656
      %2658 = vmatmul.f32.gmra.mxu0 %v2451
      %v2659 = vpop.f32.mrf.mxu0
      %v2660 = vadd.f32 %v305, %v2659
      %2661 = vmatmul.f32.gmra.mxu0 %v2454
      %v2662 = vpop.f32.mrf.mxu0
      %v2663 = vadd.f32 %v305, %v2662
      %2664 = vmatmul.f32.gmra.mxu0 %v2457
      %v2665 = vpop.f32.mrf.mxu0
      %v2666 = vadd.f32 %v305, %v2665
      %2667 = vmatmul.f32.gmra.mxu0 %v2460
      %v2668 = vpop.f32.mrf.mxu0
      %v2669 = vadd.f32 %v305, %v2668
      %2670 = vmatmul.f32.gmra.mxu0 %v2463
      %v2671 = vpop.f32.mrf.mxu0
      %v2672 = vadd.f32 %v305, %v2671
      %2673 = vmatmul.f32.gmra.mxu0 %v2466
      %v2674 = vpop.f32.mrf.mxu0
      %v2675 = vadd.f32 %v305, %v2674
      %2676 = vmatmul.f32.gmra.mxu0 %v2469
      %v2677 = vpop.f32.mrf.mxu0
      %v2678 = vadd.f32 %v305, %v2677
      %2679 = vmatmul.f32.gmra.mxu0 %v2472
      %v2680 = vpop.f32.mrf.mxu0
      %v2681 = vadd.f32 %v305, %v2680
      %2682 = vmatmul.f32.gmra.mxu0 %v2475
      %v2683 = vpop.f32.mrf.mxu0
      %v2684 = vadd.f32 %v305, %v2683
      %2685 = vmatmul.f32.gmra.mxu0 %v2478
      %v2686 = vpop.f32.mrf.mxu0
      %v2687 = vadd.f32 %v305, %v2686
      %2688 = vmatmul.f32.gmra.mxu0 %v2481
      %v2689 = vpop.f32.mrf.mxu0
      %v2690 = vadd.f32 %v305, %v2689
      %2691 = vmatmul.f32.gmra.mxu0 %v2484
      %v2692 = vpop.f32.mrf.mxu0
      %v2693 = vadd.f32 %v305, %v2692
      %2694 = vmatmul.f32.gmra.mxu0 %v2487
      %v2695 = vpop.f32.mrf.mxu0
      %v2696 = vadd.f32 %v305, %v2695
      %2697 = vmatmul.f32.gmra.mxu0 %v2490
      %v2698 = vpop.f32.mrf.mxu0
      %v2699 = vadd.f32 %v305, %v2698
      %2700 = vmatmul.f32.gmra.mxu0 %v2493
      %v2701 = vpop.f32.mrf.mxu0
      %v2702 = vadd.f32 %v305, %v2701
      %2703 = vmatmul.f32.gmra.mxu0 %v2496
      %v2704 = vpop.f32.mrf.mxu0
      %v2705 = vadd.f32 %v305, %v2704
      %2706 = vdwg.mxu0
      %v2707 = vmax.f32 %v2516, 0.0
      %v2708 = vmax.f32 %v2519, 0.0
      %v2709 = vmax.f32 %v2522, 0.0
      %v2710 = vmax.f32 %v2525, 0.0
      %v2711 = vmax.f32 %v2528, 0.0
      %v2712 = vmax.f32 %v2531, 0.0
      %v2713 = vmax.f32 %v2534, 0.0
      %v2714 = vmax.f32 %v2537, 0.0
      %v2715 = vmax.f32 %v2540, 0.0
      %v2716 = vmax.f32 %v2543, 0.0
      %v2717 = vmax.f32 %v2546, 0.0
      %v2718 = vmax.f32 %v2549, 0.0
      %v2719 = vmax.f32 %v2552, 0.0
      %v2720 = vmax.f32 %v2555, 0.0
      %v2721 = vmax.f32 %v2558, 0.0
      %v2722 = vmax.f32 %v2561, 0.0
      %v2723 = vmax.f32 %v2564, 0.0
      %v2724 = vmax.f32 %v2567, 0.0
      %v2725 = vmax.f32 %v2570, 0.0
      %v2726 = vmax.f32 %v2573, 0.0
      %v2727 = vmax.f32 %v2576, 0.0
      %v2728 = vmax.f32 %v2579, 0.0
      %v2729 = vmax.f32 %v2582, 0.0
      %v2730 = vmax.f32 %v2585, 0.0
      %v2731 = vmax.f32 %v2588, 0.0
      %v2732 = vmax.f32 %v2591, 0.0
      %v2733 = vmax.f32 %v2594, 0.0
      %v2734 = vmax.f32 %v2597, 0.0
      %v2735 = vmax.f32 %v2600, 0.0
      %v2736 = vmax.f32 %v2603, 0.0
      %v2737 = vmax.f32 %v2606, 0.0
      %v2738 = vmax.f32 %v2609, 0.0
      %v2739 = vmax.f32 %v2612, 0.0
      %v2740 = vmax.f32 %v2615, 0.0
      %v2741 = vmax.f32 %v2618, 0.0
      %v2742 = vmax.f32 %v2621, 0.0
      %v2743 = vmax.f32 %v2624, 0.0
      %v2744 = vmax.f32 %v2627, 0.0
      %v2745 = vmax.f32 %v2630, 0.0
      %v2746 = vmax.f32 %v2633, 0.0
      %v2747 = vmax.f32 %v2636, 0.0
      %v2748 = vmax.f32 %v2639, 0.0
      %v2749 = vmax.f32 %v2642, 0.0
      %v2750 = vmax.f32 %v2645, 0.0
      %v2751 = vmax.f32 %v2648, 0.0
      %v2752 = vmax.f32 %v2651, 0.0
      %v2753 = vmax.f32 %v2654, 0.0
      %v2754 = vmax.f32 %v2657, 0.0
      %v2755 = vmax.f32 %v2660, 0.0
      %v2756 = vmax.f32 %v2663, 0.0
      %v2757 = vmax.f32 %v2666, 0.0
      %v2758 = vmax.f32 %v2669, 0.0
      %v2759 = vmax.f32 %v2672, 0.0
      %v2760 = vmax.f32 %v2675, 0.0
      %v2761 = vmax.f32 %v2678, 0.0
      %v2762 = vmax.f32 %v2681, 0.0
      %v2763 = vmax.f32 %v2684, 0.0
      %v2764 = vmax.f32 %v2687, 0.0
      %v2765 = vmax.f32 %v2690, 0.0
      %v2766 = vmax.f32 %v2693, 0.0
      %v2767 = vmax.f32 %v2696, 0.0
      %v2768 = vmax.f32 %v2699, 0.0
      %v2769 = vmax.f32 %v2702, 0.0
      %v2770 = vmax.f32 %v2705, 0.0
      %v2772 = vsel %vm845, %v2707, 0
      %v2775 = vsel %vm845, %v2708, 0
      %v2778 = vsel %vm845, %v2709, 0
      %v2781 = vsel %vm845, %v2710, 0
      %v2784 = vsel %vm845, %v2711, 0
      %v2787 = vsel %vm845, %v2712, 0
      %v2790 = vsel %vm845, %v2713, 0
      %v2793 = vsel %vm845, %v2714, 0
      %v2796 = vsel %vm845, %v2715, 0
      %v2799 = vsel %vm845, %v2716, 0
      %v2802 = vsel %vm845, %v2717, 0
      %v2805 = vsel %vm845, %v2718, 0
      %v2808 = vsel %vm845, %v2719, 0
      %v2811 = vsel %vm845, %v2720, 0
      %v2814 = vsel %vm845, %v2721, 0
      %v2817 = vsel %vm845, %v2722, 0
      %v2820 = vsel %vm845, %v2723, 0
      %v2823 = vsel %vm845, %v2724, 0
      %v2826 = vsel %vm845, %v2725, 0
      %v2829 = vsel %vm845, %v2726, 0
      %v2832 = vsel %vm845, %v2727, 0
      %v2835 = vsel %vm845, %v2728, 0
      %v2838 = vsel %vm845, %v2729, 0
      %v2841 = vsel %vm845, %v2730, 0
      %v2844 = vsel %vm845, %v2731, 0
      %v2847 = vsel %vm845, %v2732, 0
      %v2850 = vsel %vm845, %v2733, 0
      %v2853 = vsel %vm845, %v2734, 0
      %v2856 = vsel %vm845, %v2735, 0
      %v2859 = vsel %vm845, %v2736, 0
      %v2862 = vsel %vm845, %v2737, 0
      %v2865 = vsel %vm845, %v2738, 0
      %v2868 = vsel %vm845, %v2739, 0
      %v2871 = vsel %vm845, %v2740, 0
      %v2874 = vsel %vm845, %v2741, 0
      %v2877 = vsel %vm845, %v2742, 0
      %v2880 = vsel %vm845, %v2743, 0
      %v2883 = vsel %vm845, %v2744, 0
      %v2886 = vsel %vm845, %v2745, 0
      %v2889 = vsel %vm845, %v2746, 0
      %v2892 = vsel %vm845, %v2747, 0
      %v2895 = vsel %vm845, %v2748, 0
      %v2898 = vsel %vm845, %v2749, 0
      %v2901 = vsel %vm845, %v2750, 0
      %v2904 = vsel %vm845, %v2751, 0
      %v2907 = vsel %vm845, %v2752, 0
      %v2910 = vsel %vm845, %v2753, 0
      %v2913 = vsel %vm845, %v2754, 0
      %v2916 = vsel %vm845, %v2755, 0
      %v2919 = vsel %vm845, %v2756, 0
      %v2922 = vsel %vm845, %v2757, 0
      %v2925 = vsel %vm845, %v2758, 0
      %v2928 = vsel %vm845, %v2759, 0
      %v2931 = vsel %vm845, %v2760, 0
      %v2934 = vsel %vm845, %v2761, 0
      %v2937 = vsel %vm845, %v2762, 0
      %v2940 = vsel %vm845, %v2763, 0
      %v2943 = vsel %vm845, %v2764, 0
      %v2946 = vsel %vm845, %v2765, 0
      %v2949 = vsel %vm845, %v2766, 0
      %v2952 = vsel %vm845, %v2767, 0
      %v2955 = vsel %vm845, %v2768, 0
      %v2958 = vsel %vm845, %v2769, 0
      %v2961 = vsel %vm845, %v2770, 0
      %2963 = vmatpush.msra.mxu0 0.0
      %2964 = vmatpush.msra.mxu0 0.0
      %2965 = vmatpush.msra.mxu0 0.0
      %2966 = vmatpush.msra.mxu0 0.0
      %2967 = vmatpush.msra.mxu0 0.0
      %2968 = vmatpush.msra.mxu0 0.0
      %2969 = vmatpush.msra.mxu0 0.0
      %2970 = vmatpush.msra.mxu0 0.0
      %2971 = vmatpush.msra.mxu0 %v298
      %2972 = vmatpush.msra.mxu0 %v297
      %2973 = vmatpush.msra.mxu0 %v296
      %2974 = vmatpush.msra.mxu0 %v295
      %2975 = vmatpush.msra.mxu0 %v294
      %2976 = vmatpush.msra.mxu0 %v293
      %2977 = vmatpush.msra.mxu0 %v292
      %2978 = vmatpush.msra.mxu0 %v291
      %2979 = vmatmul.f32.gmra.mxu0 %v2772
      %v2980 = vpop.f32.mrf.mxu0
      %v2981 = vadd.f32 %v309, %v2980
      %2982 = vmatmul.f32.gmra.mxu0 %v2775
      %v2983 = vpop.f32.mrf.mxu0
      %v2984 = vadd.f32 %v309, %v2983
      %2985 = vmatmul.f32.gmra.mxu0 %v2778
      %v2986 = vpop.f32.mrf.mxu0
      %v2987 = vadd.f32 %v309, %v2986
      %2988 = vmatmul.f32.gmra.mxu0 %v2781
      %v2989 = vpop.f32.mrf.mxu0
      %v2990 = vadd.f32 %v309, %v2989
      %2991 = vmatmul.f32.gmra.mxu0 %v2784
      %v2992 = vpop.f32.mrf.mxu0
      %v2993 = vadd.f32 %v309, %v2992
      %2994 = vmatmul.f32.gmra.mxu0 %v2787
      %v2995 = vpop.f32.mrf.mxu0
      %v2996 = vadd.f32 %v309, %v2995
      %2997 = vmatmul.f32.gmra.mxu0 %v2790
      %v2998 = vpop.f32.mrf.mxu0
      %v2999 = vadd.f32 %v309, %v2998
      %3000 = vmatmul.f32.gmra.mxu0 %v2793
      %v3001 = vpop.f32.mrf.mxu0
      %v3002 = vadd.f32 %v309, %v3001
      %3003 = vmatmul.f32.gmra.mxu0 %v2796
      %v3004 = vpop.f32.mrf.mxu0
      %v3005 = vadd.f32 %v309, %v3004
      %3006 = vmatmul.f32.gmra.mxu0 %v2799
      %v3007 = vpop.f32.mrf.mxu0
      %v3008 = vadd.f32 %v309, %v3007
      %3009 = vmatmul.f32.gmra.mxu0 %v2802
      %v3010 = vpop.f32.mrf.mxu0
      %v3011 = vadd.f32 %v309, %v3010
      %3012 = vmatmul.f32.gmra.mxu0 %v2805
      %v3013 = vpop.f32.mrf.mxu0
      %v3014 = vadd.f32 %v309, %v3013
      %3015 = vmatmul.f32.gmra.mxu0 %v2808
      %v3016 = vpop.f32.mrf.mxu0
      %v3017 = vadd.f32 %v309, %v3016
      %3018 = vmatmul.f32.gmra.mxu0 %v2811
      %v3019 = vpop.f32.mrf.mxu0
      %v3020 = vadd.f32 %v309, %v3019
      %3021 = vmatmul.f32.gmra.mxu0 %v2814
      %v3022 = vpop.f32.mrf.mxu0
      %v3023 = vadd.f32 %v309, %v3022
      %3024 = vmatmul.f32.gmra.mxu0 %v2817
      %v3025 = vpop.f32.mrf.mxu0
      %v3026 = vadd.f32 %v309, %v3025
      %3027 = vmatmul.f32.gmra.mxu0 %v2820
      %v3028 = vpop.f32.mrf.mxu0
      %v3029 = vadd.f32 %v309, %v3028
      %3030 = vmatmul.f32.gmra.mxu0 %v2823
      %v3031 = vpop.f32.mrf.mxu0
      %v3032 = vadd.f32 %v309, %v3031
      %3033 = vmatmul.f32.gmra.mxu0 %v2826
      %v3034 = vpop.f32.mrf.mxu0
      %v3035 = vadd.f32 %v309, %v3034
      %3036 = vmatmul.f32.gmra.mxu0 %v2829
      %v3037 = vpop.f32.mrf.mxu0
      %v3038 = vadd.f32 %v309, %v3037
      %3039 = vmatmul.f32.gmra.mxu0 %v2832
      %v3040 = vpop.f32.mrf.mxu0
      %v3041 = vadd.f32 %v309, %v3040
      %3042 = vmatmul.f32.gmra.mxu0 %v2835
      %v3043 = vpop.f32.mrf.mxu0
      %v3044 = vadd.f32 %v309, %v3043
      %3045 = vmatmul.f32.gmra.mxu0 %v2838
      %v3046 = vpop.f32.mrf.mxu0
      %v3047 = vadd.f32 %v309, %v3046
      %3048 = vmatmul.f32.gmra.mxu0 %v2841
      %v3049 = vpop.f32.mrf.mxu0
      %v3050 = vadd.f32 %v309, %v3049
      %3051 = vmatmul.f32.gmra.mxu0 %v2844
      %v3052 = vpop.f32.mrf.mxu0
      %v3053 = vadd.f32 %v309, %v3052
      %3054 = vmatmul.f32.gmra.mxu0 %v2847
      %v3055 = vpop.f32.mrf.mxu0
      %v3056 = vadd.f32 %v309, %v3055
      %3057 = vmatmul.f32.gmra.mxu0 %v2850
      %v3058 = vpop.f32.mrf.mxu0
      %v3059 = vadd.f32 %v309, %v3058
      %3060 = vmatmul.f32.gmra.mxu0 %v2853
      %v3061 = vpop.f32.mrf.mxu0
      %v3062 = vadd.f32 %v309, %v3061
      %3063 = vmatmul.f32.gmra.mxu0 %v2856
      %v3064 = vpop.f32.mrf.mxu0
      %v3065 = vadd.f32 %v309, %v3064
      %3066 = vmatmul.f32.gmra.mxu0 %v2859
      %v3067 = vpop.f32.mrf.mxu0
      %v3068 = vadd.f32 %v309, %v3067
      %3069 = vmatmul.f32.gmra.mxu0 %v2862
      %v3070 = vpop.f32.mrf.mxu0
      %v3071 = vadd.f32 %v309, %v3070
      %3072 = vmatmul.f32.gmra.mxu0 %v2865
      %v3073 = vpop.f32.mrf.mxu0
      %v3074 = vadd.f32 %v309, %v3073
      %3075 = vmatmul.f32.gmra.mxu0 %v2868
      %v3076 = vpop.f32.mrf.mxu0
      %v3077 = vadd.f32 %v309, %v3076
      %3078 = vmatmul.f32.gmra.mxu0 %v2871
      %v3079 = vpop.f32.mrf.mxu0
      %v3080 = vadd.f32 %v309, %v3079
      %3081 = vmatmul.f32.gmra.mxu0 %v2874
      %v3082 = vpop.f32.mrf.mxu0
      %v3083 = vadd.f32 %v309, %v3082
      %3084 = vmatmul.f32.gmra.mxu0 %v2877
      %v3085 = vpop.f32.mrf.mxu0
      %v3086 = vadd.f32 %v309, %v3085
      %3087 = vmatmul.f32.gmra.mxu0 %v2880
      %v3088 = vpop.f32.mrf.mxu0
      %v3089 = vadd.f32 %v309, %v3088
      %3090 = vmatmul.f32.gmra.mxu0 %v2883
      %v3091 = vpop.f32.mrf.mxu0
      %v3092 = vadd.f32 %v309, %v3091
      %3093 = vmatmul.f32.gmra.mxu0 %v2886
      %v3094 = vpop.f32.mrf.mxu0
      %v3095 = vadd.f32 %v309, %v3094
      %3096 = vmatmul.f32.gmra.mxu0 %v2889
      %v3097 = vpop.f32.mrf.mxu0
      %v3098 = vadd.f32 %v309, %v3097
      %3099 = vmatmul.f32.gmra.mxu0 %v2892
      %v3100 = vpop.f32.mrf.mxu0
      %v3101 = vadd.f32 %v309, %v3100
      %3102 = vmatmul.f32.gmra.mxu0 %v2895
      %v3103 = vpop.f32.mrf.mxu0
      %v3104 = vadd.f32 %v309, %v3103
      %3105 = vmatmul.f32.gmra.mxu0 %v2898
      %v3106 = vpop.f32.mrf.mxu0
      %v3107 = vadd.f32 %v309, %v3106
      %3108 = vmatmul.f32.gmra.mxu0 %v2901
      %v3109 = vpop.f32.mrf.mxu0
      %v3110 = vadd.f32 %v309, %v3109
      %3111 = vmatmul.f32.gmra.mxu0 %v2904
      %v3112 = vpop.f32.mrf.mxu0
      %v3113 = vadd.f32 %v309, %v3112
      %3114 = vmatmul.f32.gmra.mxu0 %v2907
      %v3115 = vpop.f32.mrf.mxu0
      %v3116 = vadd.f32 %v309, %v3115
      %3117 = vmatmul.f32.gmra.mxu0 %v2910
      %v3118 = vpop.f32.mrf.mxu0
      %v3119 = vadd.f32 %v309, %v3118
      %3120 = vmatmul.f32.gmra.mxu0 %v2913
      %v3121 = vpop.f32.mrf.mxu0
      %v3122 = vadd.f32 %v309, %v3121
      %3123 = vmatmul.f32.gmra.mxu0 %v2916
      %v3124 = vpop.f32.mrf.mxu0
      %v3125 = vadd.f32 %v309, %v3124
      %3126 = vmatmul.f32.gmra.mxu0 %v2919
      %v3127 = vpop.f32.mrf.mxu0
      %v3128 = vadd.f32 %v309, %v3127
      %3129 = vmatmul.f32.gmra.mxu0 %v2922
      %v3130 = vpop.f32.mrf.mxu0
      %v3131 = vadd.f32 %v309, %v3130
      %3132 = vmatmul.f32.gmra.mxu0 %v2925
      %v3133 = vpop.f32.mrf.mxu0
      %v3134 = vadd.f32 %v309, %v3133
      %3135 = vmatmul.f32.gmra.mxu0 %v2928
      %v3136 = vpop.f32.mrf.mxu0
      %v3137 = vadd.f32 %v309, %v3136
      %3138 = vmatmul.f32.gmra.mxu0 %v2931
      %v3139 = vpop.f32.mrf.mxu0
      %v3140 = vadd.f32 %v309, %v3139
      %3141 = vmatmul.f32.gmra.mxu0 %v2934
      %v3142 = vpop.f32.mrf.mxu0
      %v3143 = vadd.f32 %v309, %v3142
      %3144 = vmatmul.f32.gmra.mxu0 %v2937
      %v3145 = vpop.f32.mrf.mxu0
      %v3146 = vadd.f32 %v309, %v3145
      %3147 = vmatmul.f32.gmra.mxu0 %v2940
      %v3148 = vpop.f32.mrf.mxu0
      %v3149 = vadd.f32 %v309, %v3148
      %3150 = vmatmul.f32.gmra.mxu0 %v2943
      %v3151 = vpop.f32.mrf.mxu0
      %v3152 = vadd.f32 %v309, %v3151
      %3153 = vmatmul.f32.gmra.mxu0 %v2946
      %v3154 = vpop.f32.mrf.mxu0
      %v3155 = vadd.f32 %v309, %v3154
      %3156 = vmatmul.f32.gmra.mxu0 %v2949
      %v3157 = vpop.f32.mrf.mxu0
      %v3158 = vadd.f32 %v309, %v3157
      %3159 = vmatmul.f32.gmra.mxu0 %v2952
      %v3160 = vpop.f32.mrf.mxu0
      %v3161 = vadd.f32 %v309, %v3160
      %3162 = vmatmul.f32.gmra.mxu0 %v2955
      %v3163 = vpop.f32.mrf.mxu0
      %v3164 = vadd.f32 %v309, %v3163
      %3165 = vmatmul.f32.gmra.mxu0 %v2958
      %v3166 = vpop.f32.mrf.mxu0
      %v3167 = vadd.f32 %v309, %v3166
      %3168 = vmatmul.f32.gmra.mxu0 %v2961
      %v3169 = vpop.f32.mrf.mxu0
      %v3170 = vadd.f32 %v309, %v3169
      %3171 = vdwg.mxu0
      %s3172 = scalar_lea.vmem %s280, 512
      %3173 = vst.msk [vmem:[%s3172] sm:$0xff] %vm375, %v2981
      %3174 = vst.msk [vmem:[%s3172 + $0x8] sm:$0xff] %vm375, %v2984
      %3175 = vst.msk [vmem:[%s3172 + $0x10] sm:$0xff] %vm375, %v2987
      %3176 = vst.msk [vmem:[%s3172 + $0x18] sm:$0xff] %vm375, %v2990
      %3177 = vst.msk [vmem:[%s3172 + $0x20] sm:$0xff] %vm375, %v2993
      %3178 = vst.msk [vmem:[%s3172 + $0x28] sm:$0xff] %vm375, %v2996
      %3179 = vst.msk [vmem:[%s3172 + $0x30] sm:$0xff] %vm375, %v2999
      %3180 = vst.msk [vmem:[%s3172 + $0x38] sm:$0xff] %vm375, %v3002
      %3181 = vst.msk [vmem:[%s3172 + $0x40] sm:$0xff] %vm375, %v3005
      %3182 = vst.msk [vmem:[%s3172 + $0x48] sm:$0xff] %vm375, %v3008
      %3183 = vst.msk [vmem:[%s3172 + $0x50] sm:$0xff] %vm375, %v3011
      %3184 = vst.msk [vmem:[%s3172 + $0x58] sm:$0xff] %vm375, %v3014
      %3185 = vst.msk [vmem:[%s3172 + $0x60] sm:$0xff] %vm375, %v3017
      %3186 = vst.msk [vmem:[%s3172 + $0x68] sm:$0xff] %vm375, %v3020
      %3187 = vst.msk [vmem:[%s3172 + $0x70] sm:$0xff] %vm375, %v3023
      %3188 = vst.msk [vmem:[%s3172 + $0x78] sm:$0xff] %vm375, %v3026
      %3189 = vst.msk [vmem:[%s3172 + $0x80] sm:$0xff] %vm375, %v3029
      %3190 = vst.msk [vmem:[%s3172 + $0x88] sm:$0xff] %vm375, %v3032
      %3191 = vst.msk [vmem:[%s3172 + $0x90] sm:$0xff] %vm375, %v3035
      %3192 = vst.msk [vmem:[%s3172 + $0x98] sm:$0xff] %vm375, %v3038
      %3193 = vst.msk [vmem:[%s3172 + $0xa0] sm:$0xff] %vm375, %v3041
      %3194 = vst.msk [vmem:[%s3172 + $0xa8] sm:$0xff] %vm375, %v3044
      %3195 = vst.msk [vmem:[%s3172 + $0xb0] sm:$0xff] %vm375, %v3047
      %3196 = vst.msk [vmem:[%s3172 + $0xb8] sm:$0xff] %vm375, %v3050
      %3197 = vst.msk [vmem:[%s3172 + $0xc0] sm:$0xff] %vm375, %v3053
      %3198 = vst.msk [vmem:[%s3172 + $0xc8] sm:$0xff] %vm375, %v3056
      %3199 = vst.msk [vmem:[%s3172 + $0xd0] sm:$0xff] %vm375, %v3059
      %3200 = vst.msk [vmem:[%s3172 + $0xd8] sm:$0xff] %vm375, %v3062
      %3201 = vst.msk [vmem:[%s3172 + $0xe0] sm:$0xff] %vm375, %v3065
      %3202 = vst.msk [vmem:[%s3172 + $0xe8] sm:$0xff] %vm375, %v3068
      %3203 = vst.msk [vmem:[%s3172 + $0xf0] sm:$0xff] %vm375, %v3071
      %3204 = vst.msk [vmem:[%s3172 + $0xf8] sm:$0xff] %vm375, %v3074
      %3205 = vst.msk [vmem:[%s3172 + $0x100] sm:$0xff] %vm375, %v3077
      %3206 = vst.msk [vmem:[%s3172 + $0x108] sm:$0xff] %vm375, %v3080
      %3207 = vst.msk [vmem:[%s3172 + $0x110] sm:$0xff] %vm375, %v3083
      %3208 = vst.msk [vmem:[%s3172 + $0x118] sm:$0xff] %vm375, %v3086
      %3209 = vst.msk [vmem:[%s3172 + $0x120] sm:$0xff] %vm375, %v3089
      %3210 = vst.msk [vmem:[%s3172 + $0x128] sm:$0xff] %vm375, %v3092
      %3211 = vst.msk [vmem:[%s3172 + $0x130] sm:$0xff] %vm375, %v3095
      %3212 = vst.msk [vmem:[%s3172 + $0x138] sm:$0xff] %vm375, %v3098
      %3213 = vst.msk [vmem:[%s3172 + $0x140] sm:$0xff] %vm375, %v3101
      %3214 = vst.msk [vmem:[%s3172 + $0x148] sm:$0xff] %vm375, %v3104
      %3215 = vst.msk [vmem:[%s3172 + $0x150] sm:$0xff] %vm375, %v3107
      %3216 = vst.msk [vmem:[%s3172 + $0x158] sm:$0xff] %vm375, %v3110
      %3217 = vst.msk [vmem:[%s3172 + $0x160] sm:$0xff] %vm375, %v3113
      %3218 = vst.msk [vmem:[%s3172 + $0x168] sm:$0xff] %vm375, %v3116
      %3219 = vst.msk [vmem:[%s3172 + $0x170] sm:$0xff] %vm375, %v3119
      %3220 = vst.msk [vmem:[%s3172 + $0x178] sm:$0xff] %vm375, %v3122
      %3221 = vst.msk [vmem:[%s3172 + $0x180] sm:$0xff] %vm375, %v3125
      %3222 = vst.msk [vmem:[%s3172 + $0x188] sm:$0xff] %vm375, %v3128
      %3223 = vst.msk [vmem:[%s3172 + $0x190] sm:$0xff] %vm375, %v3131
      %3224 = vst.msk [vmem:[%s3172 + $0x198] sm:$0xff] %vm375, %v3134
      %3225 = vst.msk [vmem:[%s3172 + $0x1a0] sm:$0xff] %vm375, %v3137
      %3226 = vst.msk [vmem:[%s3172 + $0x1a8] sm:$0xff] %vm375, %v3140
      %3227 = vst.msk [vmem:[%s3172 + $0x1b0] sm:$0xff] %vm375, %v3143
      %3228 = vst.msk [vmem:[%s3172 + $0x1b8] sm:$0xff] %vm375, %v3146
      %3229 = vst.msk [vmem:[%s3172 + $0x1c0] sm:$0xff] %vm375, %v3149
      %3230 = vst.msk [vmem:[%s3172 + $0x1c8] sm:$0xff] %vm375, %v3152
      %3231 = vst.msk [vmem:[%s3172 + $0x1d0] sm:$0xff] %vm375, %v3155
      %3232 = vst.msk [vmem:[%s3172 + $0x1d8] sm:$0xff] %vm375, %v3158
      %3233 = vst.msk [vmem:[%s3172 + $0x1e0] sm:$0xff] %vm375, %v3161
      %3234 = vst.msk [vmem:[%s3172 + $0x1e8] sm:$0xff] %vm375, %v3164
      %3235 = vst.msk [vmem:[%s3172 + $0x1f0] sm:$0xff] %vm375, %v3167
      %3236 = vst.msk [vmem:[%s3172 + $0x1f8] sm:$0xff] %vm375, %v3170
      %s3237 = smul.u32 128, %s18
      %p3238 = scmp.lt.s32.totalorder %s3237, 255
      %s3239 = scalar_select %p3238, %s3237, 255
      %s3240 = smul.addr %s3239, 8
      %s3241 = scalar_lea.vmem %s7, %s3240
      // Predicated region
      $region49: #{tpu_custom_call.1} parent=47 // pred_check
        %p3242 = pneg %p188
      $region50: #{tpu_custom_call.1} parent=47 // pred_check_branch
        %3244 = sbr.rel (%p3242) target = $region52
      $region51: #{tpu_custom_call.1} parent=47 // pred_region
        %s3245 = smul.u32 128, %s18
      $region52: #{tpu_custom_call.1} parent=47 // pred_fallthru
        _
    $region48: #{tpu_custom_call.1} parent=5 // pred_fallthru
      _
    %p3246 = scmp.le.s32.totalorder 2, %s13
    // Predicated region
    $region53: #{tpu_custom_call.1} parent=5 // pred_check
      %p3247 = pneg %p3246
    $region54: #{tpu_custom_call.1} parent=5 // pred_check_branch
      %3249 = sbr.rel (%p3247) target = $region56
    $region55: #{tpu_custom_call.1} parent=5 // pred_region
      %s3250 = ssub.s32 %s13, 2
      // Predicated region
      $region57: #{tpu_custom_call.1} parent=55 // pred_check
        %p3251 = pneg %p194
      $region58: #{tpu_custom_call.1} parent=55 // pred_check_branch
        %3253 = sbr.rel (%p3251) target = $region60
      $region59: #{tpu_custom_call.1} parent=55 // pred_region
        %s3254 = smul.u32 128, %s19
        %p3255 = scmp.lt.s32.totalorder %s3254, 255
        %s3256 = scalar_select %p3255, %s3254, 255
        %s3257 = smul.addr %s3256, 8
        %s3258 = scalar_lea.vmem %s7, %s3257
      $region60: #{tpu_custom_call.1} parent=55 // pred_fallthru
        _
    $region56: #{tpu_custom_call.1} parent=5 // pred_fallthru
      _
  $region6: #{tpu_custom_call.1} parent=0 // loop_footer
    %s17 = sadd.s32 1, %s13
  $region7: #{tpu_custom_call.1} parent=0 // loop_footer_branch
    %12 = sbr.rel target = $region3
  $region8: #{tpu_custom_call.1} parent=0 // loop_exit
    _

</llo_original>
